<compile_context>
chip_gen: v6e
topology: v6e:2x2x1
jax: 0.10.0
libtpu: 0.0.40
codegen_flags: <defaults>
</compile_context>

<pallas_src>
import functools

import jax
import jax.numpy as jnp
from jax.experimental import pallas as pl
from jax.experimental.pallas import tpu as pltpu


def crf_llh_kernel(em_ref, tags_ref, start_ref, end_ref, trans_ref, out_ref,
                   *, T, K):
    # em_ref:   (T, K, Bb) VMEM   (batch on lanes)
    # tags_ref: (T, Bb)    VMEM   int32
    # start_ref/end_ref: (1, K)  SMEM,  trans_ref: (K, K) SMEM
    # out_ref:  (1, Bb)    VMEM   f32  per-example log-likelihood (lane-dense)

    # Hoist all SMEM scalar reads out of the (unrolled) time loop.
    start_s = [start_ref[0, j] for j in range(K)]
    end_s = [end_ref[0, j] for j in range(K)]
    trans_s = [[trans_ref[i, j] for j in range(K)] for i in range(K)]

    def em_row(t, j):
        return em_ref[t, j, :].astype(jnp.float32)          # (Bb,)

    zero = jnp.float32(0.0)

    # ---------------- t = 0 ----------------------------------------------
    tg0 = tags_ref[0, :]                                     # (Bb,) int32
    # NOTE: tags outside [0, K) silently contribute 0 (torchcrf would raise).
    eq = [tg0 == j for j in range(K)]                        # K x (Bb,) bool
    em0 = [em_row(0, j) for j in range(K)]

    # numerator: start transition + emission at t=0, gold-tag selected
    num = jnp.zeros_like(em0[0])
    for j in range(K):
        num = num + jnp.where(eq[j], em0[j] + start_s[j], zero)

    # denominator: alpha_j kept as K separate (Bb,) lane-dense rows
    alpha = [em0[j] + start_s[j] for j in range(K)]

    # ---------------- t = 1 .. T-1 ----------------------------------------
    # T is small & static for this module -> full Python unroll.
    # TODO(synk): for large T switch to lax.fori_loop (unroll=True for T<=32)
    # carrying (num, eq, alpha) to bound vreg live ranges.
    for t in range(1, T):
        prev_eq = eq
        tg_t = tags_ref[t, :]
        eq = [tg_t == j for j in range(K)]
        em_t = [em_row(t, j) for j in range(K)]

        # numerator: emission + pairwise transition (scalar trans operands)
        for j in range(K):
            num = num + jnp.where(eq[j], em_t[j], zero)
            for i in range(K):
                num = num + jnp.where(prev_eq[i] & eq[j], trans_s[i][j], zero)

        # denominator: K-unrolled logsumexp over source states (no (Bb,K,K)
        # intermediate, no cross-sublane reduce)
        new_alpha = []
        for j in range(K):
            vals = [alpha[i] + trans_s[i][j] for i in range(K)]
            m = vals[0]
            for i in range(1, K):
                m = jnp.maximum(m, vals[i])
            s = jnp.exp(vals[0] - m)
            for i in range(1, K):
                s = s + jnp.exp(vals[i] - m)
            new_alpha.append(m + jnp.log(s) + em_t[j])
        alpha = new_alpha

    # ---------------- end transitions & final logsumexp --------------------
    for j in range(K):
        num = num + jnp.where(eq[j], end_s[j], zero)

    fin = [alpha[j] + end_s[j] for j in range(K)]
    m = fin[0]
    for j in range(1, K):
        m = jnp.maximum(m, fin[j])
    s = jnp.exp(fin[0] - m)
    for j in range(1, K):
        s = s + jnp.exp(fin[j] - m)
    denom = m + jnp.log(s)

    out_ref[0, :] = num - denom                              # (Bb,) lane-dense


def simple_crf_loss(emissions, tags, start, end, trans, *, batch_block=128):
    """Scalar CRF NLL (torchcrf reduction='sum', mask = all ones).

    emissions: (B, T, K) float32/bfloat16 (kernel computes in f32),
    tags: (B, T) int, start/end: (1, K), trans: (K, K).
    """
    B, T, K = emissions.shape
    Bb = batch_block
    nb = pl.cdiv(B, Bb)
    if nb > 1 and nb % 2 != 0:
        nb += 1          # even grid -> v7x's 2 TensorCores get equal blocks
    B_pad = nb * Bb

    # Relayout so batch is the lane (minor) dimension.
    em_tkb = jnp.transpose(emissions, (1, 2, 0))             # (T, K, B)
    tg_tb = jnp.transpose(tags.astype(jnp.int32), (1, 0))    # (T, B)
    if B_pad != B:
        em_tkb = jnp.pad(em_tkb, ((0, 0), (0, 0), (0, B_pad - B)))
        tg_tb = jnp.pad(tg_tb, ((0, 0), (0, B_pad - B)))

    kernel = functools.partial(crf_llh_kernel, T=T, K=K)
    llh = pl.pallas_call(
        kernel,
        out_shape=jax.ShapeDtypeStruct((1, B_pad), jnp.float32),
        grid_spec=pltpu.PrefetchScalarGridSpec(
            num_scalar_prefetch=0,
            grid=(nb,),
            in_specs=[
                # emissions, batch-tiled on the lane axis
                pl.BlockSpec((T, K, Bb), lambda b: (0, 0, b)),
                # tags, batch-tiled on the lane axis
                pl.BlockSpec((T, Bb), lambda b: (0, b)),
                # CRF parameters: tiny, scalar-read -> SMEM resident
                pl.BlockSpec(memory_space=pltpu.MemorySpace.SMEM),
                pl.BlockSpec(memory_space=pltpu.MemorySpace.SMEM),
                pl.BlockSpec(memory_space=pltpu.MemorySpace.SMEM),
            ],
            out_specs=pl.BlockSpec((1, Bb), lambda b: (0, b)),
        ),
        compiler_params=pltpu.CompilerParams(
            # batch axis is independent -> shards across v7x's 2 TensorCores,
            # harmless no-op on single-TC v5e/v6e.
            dimension_semantics=("parallel",),
            # double-buffered (T, K->8, Bb) em block + (T->8, Bb) tags block is
            # tiny; 32 MiB fits every generation's scoped VMEM (incl. v7x).
            vmem_limit_bytes=32 * 1024 * 1024,
        ),
    )(em_tkb, tg_tb, start, end, trans)

    # padded batch lanes are finite garbage; slice them off before reducing.
    return -jnp.sum(llh[0, :B])


def crf_loss_reference(emissions, tags, start, end, trans):
    """Pure-JAX reference matching torchcrf.CRF forward (mask=None, reduction='sum')."""
    B, T, K = emissions.shape
    start = start[0]
    end = end[0]
    b = jnp.arange(B)
    # numerator
    num = start[tags[:, 0]] + emissions[b, 0, tags[:, 0]]
    for t in range(1, T):
        num = num + trans[tags[:, t - 1], tags[:, t]] + emissions[b, t, tags[:, t]]
    num = num + end[tags[:, T - 1]]
    # denominator
    alpha = start[None, :] + emissions[:, 0, :]
    for t in range(1, T):
        x = alpha[:, :, None] + trans[None, :, :] + emissions[:, t, :][:, None, :]
        alpha = jax.scipy.special.logsumexp(x, axis=1)
    denom = jax.scipy.special.logsumexp(alpha + end[None, :], axis=-1)
    return -jnp.sum(num - denom)


if __name__ == "__main__":
    B, T, K = 2, 8, 3  # tagset_size = 3 ('B', 'I', 'O')

    key = jax.random.PRNGKey(0)
    k_em, k_tags, k_s, k_e, k_t = jax.random.split(key, 5)

    emissions = jax.random.normal(k_em, (B, T, K), dtype=jnp.float32)
    tags = jax.random.randint(k_tags, (B, T), 0, K, dtype=jnp.int32)

    # CRF parameters, uniform(-0.1, 0.1) like torchcrf's reset_parameters
    start = jax.random.uniform(k_s, (1, K), jnp.float32, -0.1, 0.1)
    end = jax.random.uniform(k_e, (1, K), jnp.float32, -0.1, 0.1)
    trans = jax.random.uniform(k_t, (K, K), jnp.float32, -0.1, 0.1)

    loss = simple_crf_loss(emissions, tags, start, end, trans)
    jax.block_until_ready(loss)
    ref = crf_loss_reference(emissions, tags, start, end, trans)
    assert jnp.allclose(loss, ref, rtol=1e-5, atol=1e-5), (loss, ref)

    # The literal emissions tensor from the original PyTorch spec (B=1, T=4).
    em2 = jnp.array([[[0.7, 0.2, 0.1], [0.7, 0.2, 0.1],
                      [0.1, 0.2, 0.7], [0.1, 0.2, 0.7]]], dtype=jnp.float32)
    tg2 = jnp.array([[0, 1, 2, 2]], dtype=jnp.int32)  # 'B','I','O','O'
    loss2 = simple_crf_loss(em2, tg2, start, end, trans)
    jax.block_until_ready(loss2)
    ref2 = crf_loss_reference(em2, tg2, start, end, trans)
    assert jnp.allclose(loss2, ref2, rtol=1e-5, atol=1e-5), (loss2, ref2)

    print("KERNEL_OK")
</pallas_src>

<mosaic_0001>
module attributes {stable_mosaic.version = 11 : i64} {
  func.func @crf_llh_kernel(%arg0: i32, %arg1: memref<8x3x128xf32, #tpu.memory_space<vmem>>, %arg2: memref<8x128xi32, #tpu.memory_space<vmem>>, %arg3: memref<1x3xf32, #tpu.memory_space<smem>>, %arg4: memref<1x3xf32, #tpu.memory_space<smem>>, %arg5: memref<3x3xf32, #tpu.memory_space<smem>>, %arg6: memref<1x128xf32, #tpu.memory_space<vmem>>) attributes {dimension_semantics = [#tpu.dimension_semantics<parallel>], iteration_bounds = array<i64: 1>, scalar_prefetch = 0 : i64, scratch_operands = 0 : i64, tpu.core_type = #tpu.core_type<tc>, window_params = [{transform_indices = @transform_0, window_bounds = array<i64: 8, 3, 128>}, {transform_indices = @transform_1, window_bounds = array<i64: 8, 128>}, {transform_indices = @transform_2, window_bounds = array<i64: 1, 3>}, {transform_indices = @transform_3, window_bounds = array<i64: 1, 3>}, {transform_indices = @transform_4, window_bounds = array<i64: 3, 3>}, {transform_indices = @transform_5, window_bounds = array<i64: 1, 128>}]} {
    %c0 = arith.constant 0 : index
    %c0_0 = arith.constant 0 : index
    %0 = memref.load %arg3[%c0, %c0_0] : memref<1x3xf32, #tpu.memory_space<smem>>
    %c0_1 = arith.constant 0 : index
    %c1 = arith.constant 1 : index
    %1 = memref.load %arg3[%c0_1, %c1] : memref<1x3xf32, #tpu.memory_space<smem>>
    %c0_2 = arith.constant 0 : index
    %c2 = arith.constant 2 : index
    %2 = memref.load %arg3[%c0_2, %c2] : memref<1x3xf32, #tpu.memory_space<smem>>
    %c0_3 = arith.constant 0 : index
    %c0_4 = arith.constant 0 : index
    %3 = memref.load %arg4[%c0_3, %c0_4] : memref<1x3xf32, #tpu.memory_space<smem>>
    %c0_5 = arith.constant 0 : index
    %c1_6 = arith.constant 1 : index
    %4 = memref.load %arg4[%c0_5, %c1_6] : memref<1x3xf32, #tpu.memory_space<smem>>
    %c0_7 = arith.constant 0 : index
    %c2_8 = arith.constant 2 : index
    %5 = memref.load %arg4[%c0_7, %c2_8] : memref<1x3xf32, #tpu.memory_space<smem>>
    %c0_9 = arith.constant 0 : index
    %c0_10 = arith.constant 0 : index
    %6 = memref.load %arg5[%c0_9, %c0_10] : memref<3x3xf32, #tpu.memory_space<smem>>
    %c0_11 = arith.constant 0 : index
    %c1_12 = arith.constant 1 : index
    %7 = memref.load %arg5[%c0_11, %c1_12] : memref<3x3xf32, #tpu.memory_space<smem>>
    %c0_13 = arith.constant 0 : index
    %c2_14 = arith.constant 2 : index
    %8 = memref.load %arg5[%c0_13, %c2_14] : memref<3x3xf32, #tpu.memory_space<smem>>
    %c1_15 = arith.constant 1 : index
    %c0_16 = arith.constant 0 : index
    %9 = memref.load %arg5[%c1_15, %c0_16] : memref<3x3xf32, #tpu.memory_space<smem>>
    %c1_17 = arith.constant 1 : index
    %c1_18 = arith.constant 1 : index
    %10 = memref.load %arg5[%c1_17, %c1_18] : memref<3x3xf32, #tpu.memory_space<smem>>
    %c1_19 = arith.constant 1 : index
    %c2_20 = arith.constant 2 : index
    %11 = memref.load %arg5[%c1_19, %c2_20] : memref<3x3xf32, #tpu.memory_space<smem>>
    %c2_21 = arith.constant 2 : index
    %c0_22 = arith.constant 0 : index
    %12 = memref.load %arg5[%c2_21, %c0_22] : memref<3x3xf32, #tpu.memory_space<smem>>
    %c2_23 = arith.constant 2 : index
    %c1_24 = arith.constant 1 : index
    %13 = memref.load %arg5[%c2_23, %c1_24] : memref<3x3xf32, #tpu.memory_space<smem>>
    %c2_25 = arith.constant 2 : index
    %c2_26 = arith.constant 2 : index
    %14 = memref.load %arg5[%c2_25, %c2_26] : memref<3x3xf32, #tpu.memory_space<smem>>
    %c0_27 = arith.constant 0 : index
    %c0_28 = arith.constant 0 : index
    %15 = vector.load %arg2[%c0_27, %c0_28] : memref<8x128xi32, #tpu.memory_space<vmem>>, vector<1x128xi32>
    %16 = vector.shape_cast %15 : vector<1x128xi32> to vector<128xi32>
    %c0_i32 = arith.constant 0 : i32
    %17 = vector.broadcast %c0_i32 : i32 to vector<128xi32>
    %18 = arith.cmpi eq, %16, %17 : vector<128xi32>
    %c1_i32 = arith.constant 1 : i32
    %19 = vector.broadcast %c1_i32 : i32 to vector<128xi32>
    %20 = arith.cmpi eq, %16, %19 : vector<128xi32>
    %c2_i32 = arith.constant 2 : i32
    %21 = vector.broadcast %c2_i32 : i32 to vector<128xi32>
    %22 = arith.cmpi eq, %16, %21 : vector<128xi32>
    %c0_29 = arith.constant 0 : index
    %c0_30 = arith.constant 0 : index
    %c0_31 = arith.constant 0 : index
    %23 = vector.load %arg1[%c0_29, %c0_30, %c0_31] : memref<8x3x128xf32, #tpu.memory_space<vmem>>, vector<1x1x128xf32>
    %24 = vector.shape_cast %23 : vector<1x1x128xf32> to vector<128xf32>
    %c0_32 = arith.constant 0 : index
    %c1_33 = arith.constant 1 : index
    %c0_34 = arith.constant 0 : index
    %25 = vector.load %arg1[%c0_32, %c1_33, %c0_34] : memref<8x3x128xf32, #tpu.memory_space<vmem>>, vector<1x1x128xf32>
    %26 = vector.shape_cast %25 : vector<1x1x128xf32> to vector<128xf32>
    %c0_35 = arith.constant 0 : index
    %c2_36 = arith.constant 2 : index
    %c0_37 = arith.constant 0 : index
    %27 = vector.load %arg1[%c0_35, %c2_36, %c0_37] : memref<8x3x128xf32, #tpu.memory_space<vmem>>, vector<1x1x128xf32>
    %28 = vector.shape_cast %27 : vector<1x1x128xf32> to vector<128xf32>
    %cst = arith.constant 0.000000e+00 : f32
    %29 = vector.broadcast %cst : f32 to vector<128xf32>
    %30 = vector.broadcast %0 : f32 to vector<128xf32>
    %31 = arith.addf %24, %30 : vector<128xf32>
    %cst_38 = arith.constant 0.000000e+00 : f32
    %32 = vector.broadcast %cst_38 : f32 to vector<128xf32>
    %33 = arith.select %18, %31, %32 : vector<128xi1>, vector<128xf32>
    %34 = arith.addf %29, %33 : vector<128xf32>
    %35 = vector.broadcast %1 : f32 to vector<128xf32>
    %36 = arith.addf %26, %35 : vector<128xf32>
    %cst_39 = arith.constant 0.000000e+00 : f32
    %37 = vector.broadcast %cst_39 : f32 to vector<128xf32>
    %38 = arith.select %20, %36, %37 : vector<128xi1>, vector<128xf32>
    %39 = arith.addf %34, %38 : vector<128xf32>
    %40 = vector.broadcast %2 : f32 to vector<128xf32>
    %41 = arith.addf %28, %40 : vector<128xf32>
    %cst_40 = arith.constant 0.000000e+00 : f32
    %42 = vector.broadcast %cst_40 : f32 to vector<128xf32>
    %43 = arith.select %22, %41, %42 : vector<128xi1>, vector<128xf32>
    %44 = arith.addf %39, %43 : vector<128xf32>
    %45 = vector.broadcast %0 : f32 to vector<128xf32>
    %46 = arith.addf %24, %45 : vector<128xf32>
    %47 = vector.broadcast %1 : f32 to vector<128xf32>
    %48 = arith.addf %26, %47 : vector<128xf32>
    %49 = vector.broadcast %2 : f32 to vector<128xf32>
    %50 = arith.addf %28, %49 : vector<128xf32>
    %c1_41 = arith.constant 1 : index
    %c0_42 = arith.constant 0 : index
    %51 = vector.load %arg2[%c1_41, %c0_42] : memref<8x128xi32, #tpu.memory_space<vmem>>, vector<1x128xi32>
    %52 = vector.shape_cast %51 : vector<1x128xi32> to vector<128xi32>
    %c0_i32_43 = arith.constant 0 : i32
    %53 = vector.broadcast %c0_i32_43 : i32 to vector<128xi32>
    %54 = arith.cmpi eq, %52, %53 : vector<128xi32>
    %c1_i32_44 = arith.constant 1 : i32
    %55 = vector.broadcast %c1_i32_44 : i32 to vector<128xi32>
    %56 = arith.cmpi eq, %52, %55 : vector<128xi32>
    %c2_i32_45 = arith.constant 2 : i32
    %57 = vector.broadcast %c2_i32_45 : i32 to vector<128xi32>
    %58 = arith.cmpi eq, %52, %57 : vector<128xi32>
    %c1_46 = arith.constant 1 : index
    %c0_47 = arith.constant 0 : index
    %c0_48 = arith.constant 0 : index
    %59 = vector.load %arg1[%c1_46, %c0_47, %c0_48] : memref<8x3x128xf32, #tpu.memory_space<vmem>>, vector<1x1x128xf32>
    %60 = vector.shape_cast %59 : vector<1x1x128xf32> to vector<128xf32>
    %c1_49 = arith.constant 1 : index
    %c1_50 = arith.constant 1 : index
    %c0_51 = arith.constant 0 : index
    %61 = vector.load %arg1[%c1_49, %c1_50, %c0_51] : memref<8x3x128xf32, #tpu.memory_space<vmem>>, vector<1x1x128xf32>
    %62 = vector.shape_cast %61 : vector<1x1x128xf32> to vector<128xf32>
    %c1_52 = arith.constant 1 : index
    %c2_53 = arith.constant 2 : index
    %c0_54 = arith.constant 0 : index
    %63 = vector.load %arg1[%c1_52, %c2_53, %c0_54] : memref<8x3x128xf32, #tpu.memory_space<vmem>>, vector<1x1x128xf32>
    %64 = vector.shape_cast %63 : vector<1x1x128xf32> to vector<128xf32>
    %cst_55 = arith.constant 0.000000e+00 : f32
    %65 = vector.broadcast %cst_55 : f32 to vector<128xf32>
    %66 = arith.select %54, %60, %65 : vector<128xi1>, vector<128xf32>
    %67 = arith.addf %44, %66 : vector<128xf32>
    %68 = arith.andi %18, %54 : vector<128xi1>
    %cst_56 = arith.constant 0.000000e+00 : f32
    %69 = vector.broadcast %6 : f32 to vector<128xf32>
    %70 = vector.broadcast %cst_56 : f32 to vector<128xf32>
    %71 = arith.select %68, %69, %70 : vector<128xi1>, vector<128xf32>
    %72 = arith.addf %67, %71 : vector<128xf32>
    %73 = arith.andi %20, %54 : vector<128xi1>
    %cst_57 = arith.constant 0.000000e+00 : f32
    %74 = vector.broadcast %9 : f32 to vector<128xf32>
    %75 = vector.broadcast %cst_57 : f32 to vector<128xf32>
    %76 = arith.select %73, %74, %75 : vector<128xi1>, vector<128xf32>
    %77 = arith.addf %72, %76 : vector<128xf32>
    %78 = arith.andi %22, %54 : vector<128xi1>
    %cst_58 = arith.constant 0.000000e+00 : f32
    %79 = vector.broadcast %12 : f32 to vector<128xf32>
    %80 = vector.broadcast %cst_58 : f32 to vector<128xf32>
    %81 = arith.select %78, %79, %80 : vector<128xi1>, vector<128xf32>
    %82 = arith.addf %77, %81 : vector<128xf32>
    %cst_59 = arith.constant 0.000000e+00 : f32
    %83 = vector.broadcast %cst_59 : f32 to vector<128xf32>
    %84 = arith.select %56, %62, %83 : vector<128xi1>, vector<128xf32>
    %85 = arith.addf %82, %84 : vector<128xf32>
    %86 = arith.andi %18, %56 : vector<128xi1>
    %cst_60 = arith.constant 0.000000e+00 : f32
    %87 = vector.broadcast %7 : f32 to vector<128xf32>
    %88 = vector.broadcast %cst_60 : f32 to vector<128xf32>
    %89 = arith.select %86, %87, %88 : vector<128xi1>, vector<128xf32>
    %90 = arith.addf %85, %89 : vector<128xf32>
    %91 = arith.andi %20, %56 : vector<128xi1>
    %cst_61 = arith.constant 0.000000e+00 : f32
    %92 = vector.broadcast %10 : f32 to vector<128xf32>
    %93 = vector.broadcast %cst_61 : f32 to vector<128xf32>
    %94 = arith.select %91, %92, %93 : vector<128xi1>, vector<128xf32>
    %95 = arith.addf %90, %94 : vector<128xf32>
    %96 = arith.andi %22, %56 : vector<128xi1>
    %cst_62 = arith.constant 0.000000e+00 : f32
    %97 = vector.broadcast %13 : f32 to vector<128xf32>
    %98 = vector.broadcast %cst_62 : f32 to vector<128xf32>
    %99 = arith.select %96, %97, %98 : vector<128xi1>, vector<128xf32>
    %100 = arith.addf %95, %99 : vector<128xf32>
    %cst_63 = arith.constant 0.000000e+00 : f32
    %101 = vector.broadcast %cst_63 : f32 to vector<128xf32>
    %102 = arith.select %58, %64, %101 : vector<128xi1>, vector<128xf32>
    %103 = arith.addf %100, %102 : vector<128xf32>
    %104 = arith.andi %18, %58 : vector<128xi1>
    %cst_64 = arith.constant 0.000000e+00 : f32
    %105 = vector.broadcast %8 : f32 to vector<128xf32>
    %106 = vector.broadcast %cst_64 : f32 to vector<128xf32>
    %107 = arith.select %104, %105, %106 : vector<128xi1>, vector<128xf32>
    %108 = arith.addf %103, %107 : vector<128xf32>
    %109 = arith.andi %20, %58 : vector<128xi1>
    %cst_65 = arith.constant 0.000000e+00 : f32
    %110 = vector.broadcast %11 : f32 to vector<128xf32>
    %111 = vector.broadcast %cst_65 : f32 to vector<128xf32>
    %112 = arith.select %109, %110, %111 : vector<128xi1>, vector<128xf32>
    %113 = arith.addf %108, %112 : vector<128xf32>
    %114 = arith.andi %22, %58 : vector<128xi1>
    %cst_66 = arith.constant 0.000000e+00 : f32
    %115 = vector.broadcast %14 : f32 to vector<128xf32>
    %116 = vector.broadcast %cst_66 : f32 to vector<128xf32>
    %117 = arith.select %114, %115, %116 : vector<128xi1>, vector<128xf32>
    %118 = arith.addf %113, %117 : vector<128xf32>
    %119 = vector.broadcast %6 : f32 to vector<128xf32>
    %120 = arith.addf %46, %119 : vector<128xf32>
    %121 = vector.broadcast %9 : f32 to vector<128xf32>
    %122 = arith.addf %48, %121 : vector<128xf32>
    %123 = vector.broadcast %12 : f32 to vector<128xf32>
    %124 = arith.addf %50, %123 : vector<128xf32>
    %125 = arith.maximumf %120, %122 : vector<128xf32>
    %126 = arith.maximumf %125, %124 : vector<128xf32>
    %127 = arith.subf %120, %126 : vector<128xf32>
    %128 = math.exp %127 : vector<128xf32>
    %129 = arith.subf %122, %126 : vector<128xf32>
    %130 = math.exp %129 : vector<128xf32>
    %131 = arith.addf %128, %130 : vector<128xf32>
    %132 = arith.subf %124, %126 : vector<128xf32>
    %133 = math.exp %132 : vector<128xf32>
    %134 = arith.addf %131, %133 : vector<128xf32>
    %135 = math.log %134 : vector<128xf32>
    %136 = arith.addf %126, %135 : vector<128xf32>
    %137 = arith.addf %136, %60 : vector<128xf32>
    %138 = vector.broadcast %7 : f32 to vector<128xf32>
    %139 = arith.addf %46, %138 : vector<128xf32>
    %140 = vector.broadcast %10 : f32 to vector<128xf32>
    %141 = arith.addf %48, %140 : vector<128xf32>
    %142 = vector.broadcast %13 : f32 to vector<128xf32>
    %143 = arith.addf %50, %142 : vector<128xf32>
    %144 = arith.maximumf %139, %141 : vector<128xf32>
    %145 = arith.maximumf %144, %143 : vector<128xf32>
    %146 = arith.subf %139, %145 : vector<128xf32>
    %147 = math.exp %146 : vector<128xf32>
    %148 = arith.subf %141, %145 : vector<128xf32>
    %149 = math.exp %148 : vector<128xf32>
    %150 = arith.addf %147, %149 : vector<128xf32>
    %151 = arith.subf %143, %145 : vector<128xf32>
    %152 = math.exp %151 : vector<128xf32>
    %153 = arith.addf %150, %152 : vector<128xf32>
    %154 = math.log %153 : vector<128xf32>
    %155 = arith.addf %145, %154 : vector<128xf32>
    %156 = arith.addf %155, %62 : vector<128xf32>
    %157 = vector.broadcast %8 : f32 to vector<128xf32>
    %158 = arith.addf %46, %157 : vector<128xf32>
    %159 = vector.broadcast %11 : f32 to vector<128xf32>
    %160 = arith.addf %48, %159 : vector<128xf32>
    %161 = vector.broadcast %14 : f32 to vector<128xf32>
    %162 = arith.addf %50, %161 : vector<128xf32>
    %163 = arith.maximumf %158, %160 : vector<128xf32>
    %164 = arith.maximumf %163, %162 : vector<128xf32>
    %165 = arith.subf %158, %164 : vector<128xf32>
    %166 = math.exp %165 : vector<128xf32>
    %167 = arith.subf %160, %164 : vector<128xf32>
    %168 = math.exp %167 : vector<128xf32>
    %169 = arith.addf %166, %168 : vector<128xf32>
    %170 = arith.subf %162, %164 : vector<128xf32>
    %171 = math.exp %170 : vector<128xf32>
    %172 = arith.addf %169, %171 : vector<128xf32>
    %173 = math.log %172 : vector<128xf32>
    %174 = arith.addf %164, %173 : vector<128xf32>
    %175 = arith.addf %174, %64 : vector<128xf32>
    %c2_67 = arith.constant 2 : index
    %c0_68 = arith.constant 0 : index
    %176 = vector.load %arg2[%c2_67, %c0_68] : memref<8x128xi32, #tpu.memory_space<vmem>>, vector<1x128xi32>
    %177 = vector.shape_cast %176 : vector<1x128xi32> to vector<128xi32>
    %c0_i32_69 = arith.constant 0 : i32
    %178 = vector.broadcast %c0_i32_69 : i32 to vector<128xi32>
    %179 = arith.cmpi eq, %177, %178 : vector<128xi32>
    %c1_i32_70 = arith.constant 1 : i32
    %180 = vector.broadcast %c1_i32_70 : i32 to vector<128xi32>
    %181 = arith.cmpi eq, %177, %180 : vector<128xi32>
    %c2_i32_71 = arith.constant 2 : i32
    %182 = vector.broadcast %c2_i32_71 : i32 to vector<128xi32>
    %183 = arith.cmpi eq, %177, %182 : vector<128xi32>
    %c2_72 = arith.constant 2 : index
    %c0_73 = arith.constant 0 : index
    %c0_74 = arith.constant 0 : index
    %184 = vector.load %arg1[%c2_72, %c0_73, %c0_74] : memref<8x3x128xf32, #tpu.memory_space<vmem>>, vector<1x1x128xf32>
    %185 = vector.shape_cast %184 : vector<1x1x128xf32> to vector<128xf32>
    %c2_75 = arith.constant 2 : index
    %c1_76 = arith.constant 1 : index
    %c0_77 = arith.constant 0 : index
    %186 = vector.load %arg1[%c2_75, %c1_76, %c0_77] : memref<8x3x128xf32, #tpu.memory_space<vmem>>, vector<1x1x128xf32>
    %187 = vector.shape_cast %186 : vector<1x1x128xf32> to vector<128xf32>
    %c2_78 = arith.constant 2 : index
    %c2_79 = arith.constant 2 : index
    %c0_80 = arith.constant 0 : index
    %188 = vector.load %arg1[%c2_78, %c2_79, %c0_80] : memref<8x3x128xf32, #tpu.memory_space<vmem>>, vector<1x1x128xf32>
    %189 = vector.shape_cast %188 : vector<1x1x128xf32> to vector<128xf32>
    %cst_81 = arith.constant 0.000000e+00 : f32
    %190 = vector.broadcast %cst_81 : f32 to vector<128xf32>
    %191 = arith.select %179, %185, %190 : vector<128xi1>, vector<128xf32>
    %192 = arith.addf %118, %191 : vector<128xf32>
    %193 = arith.andi %54, %179 : vector<128xi1>
    %cst_82 = arith.constant 0.000000e+00 : f32
    %194 = vector.broadcast %6 : f32 to vector<128xf32>
    %195 = vector.broadcast %cst_82 : f32 to vector<128xf32>
    %196 = arith.select %193, %194, %195 : vector<128xi1>, vector<128xf32>
    %197 = arith.addf %192, %196 : vector<128xf32>
    %198 = arith.andi %56, %179 : vector<128xi1>
    %cst_83 = arith.constant 0.000000e+00 : f32
    %199 = vector.broadcast %9 : f32 to vector<128xf32>
    %200 = vector.broadcast %cst_83 : f32 to vector<128xf32>
    %201 = arith.select %198, %199, %200 : vector<128xi1>, vector<128xf32>
    %202 = arith.addf %197, %201 : vector<128xf32>
    %203 = arith.andi %58, %179 : vector<128xi1>
    %cst_84 = arith.constant 0.000000e+00 : f32
    %204 = vector.broadcast %12 : f32 to vector<128xf32>
    %205 = vector.broadcast %cst_84 : f32 to vector<128xf32>
    %206 = arith.select %203, %204, %205 : vector<128xi1>, vector<128xf32>
    %207 = arith.addf %202, %206 : vector<128xf32>
    %cst_85 = arith.constant 0.000000e+00 : f32
    %208 = vector.broadcast %cst_85 : f32 to vector<128xf32>
    %209 = arith.select %181, %187, %208 : vector<128xi1>, vector<128xf32>
    %210 = arith.addf %207, %209 : vector<128xf32>
    %211 = arith.andi %54, %181 : vector<128xi1>
    %cst_86 = arith.constant 0.000000e+00 : f32
    %212 = vector.broadcast %7 : f32 to vector<128xf32>
    %213 = vector.broadcast %cst_86 : f32 to vector<128xf32>
    %214 = arith.select %211, %212, %213 : vector<128xi1>, vector<128xf32>
    %215 = arith.addf %210, %214 : vector<128xf32>
    %216 = arith.andi %56, %181 : vector<128xi1>
    %cst_87 = arith.constant 0.000000e+00 : f32
    %217 = vector.broadcast %10 : f32 to vector<128xf32>
    %218 = vector.broadcast %cst_87 : f32 to vector<128xf32>
    %219 = arith.select %216, %217, %218 : vector<128xi1>, vector<128xf32>
    %220 = arith.addf %215, %219 : vector<128xf32>
    %221 = arith.andi %58, %181 : vector<128xi1>
    %cst_88 = arith.constant 0.000000e+00 : f32
    %222 = vector.broadcast %13 : f32 to vector<128xf32>
    %223 = vector.broadcast %cst_88 : f32 to vector<128xf32>
    %224 = arith.select %221, %222, %223 : vector<128xi1>, vector<128xf32>
    %225 = arith.addf %220, %224 : vector<128xf32>
    %cst_89 = arith.constant 0.000000e+00 : f32
    %226 = vector.broadcast %cst_89 : f32 to vector<128xf32>
    %227 = arith.select %183, %189, %226 : vector<128xi1>, vector<128xf32>
    %228 = arith.addf %225, %227 : vector<128xf32>
    %229 = arith.andi %54, %183 : vector<128xi1>
    %cst_90 = arith.constant 0.000000e+00 : f32
    %230 = vector.broadcast %8 : f32 to vector<128xf32>
    %231 = vector.broadcast %cst_90 : f32 to vector<128xf32>
    %232 = arith.select %229, %230, %231 : vector<128xi1>, vector<128xf32>
    %233 = arith.addf %228, %232 : vector<128xf32>
    %234 = arith.andi %56, %183 : vector<128xi1>
    %cst_91 = arith.constant 0.000000e+00 : f32
    %235 = vector.broadcast %11 : f32 to vector<128xf32>
    %236 = vector.broadcast %cst_91 : f32 to vector<128xf32>
    %237 = arith.select %234, %235, %236 : vector<128xi1>, vector<128xf32>
    %238 = arith.addf %233, %237 : vector<128xf32>
    %239 = arith.andi %58, %183 : vector<128xi1>
    %cst_92 = arith.constant 0.000000e+00 : f32
    %240 = vector.broadcast %14 : f32 to vector<128xf32>
    %241 = vector.broadcast %cst_92 : f32 to vector<128xf32>
    %242 = arith.select %239, %240, %241 : vector<128xi1>, vector<128xf32>
    %243 = arith.addf %238, %242 : vector<128xf32>
    %244 = vector.broadcast %6 : f32 to vector<128xf32>
    %245 = arith.addf %137, %244 : vector<128xf32>
    %246 = vector.broadcast %9 : f32 to vector<128xf32>
    %247 = arith.addf %156, %246 : vector<128xf32>
    %248 = vector.broadcast %12 : f32 to vector<128xf32>
    %249 = arith.addf %175, %248 : vector<128xf32>
    %250 = arith.maximumf %245, %247 : vector<128xf32>
    %251 = arith.maximumf %250, %249 : vector<128xf32>
    %252 = arith.subf %245, %251 : vector<128xf32>
    %253 = math.exp %252 : vector<128xf32>
    %254 = arith.subf %247, %251 : vector<128xf32>
    %255 = math.exp %254 : vector<128xf32>
    %256 = arith.addf %253, %255 : vector<128xf32>
    %257 = arith.subf %249, %251 : vector<128xf32>
    %258 = math.exp %257 : vector<128xf32>
    %259 = arith.addf %256, %258 : vector<128xf32>
    %260 = math.log %259 : vector<128xf32>
    %261 = arith.addf %251, %260 : vector<128xf32>
    %262 = arith.addf %261, %185 : vector<128xf32>
    %263 = vector.broadcast %7 : f32 to vector<128xf32>
    %264 = arith.addf %137, %263 : vector<128xf32>
    %265 = vector.broadcast %10 : f32 to vector<128xf32>
    %266 = arith.addf %156, %265 : vector<128xf32>
    %267 = vector.broadcast %13 : f32 to vector<128xf32>
    %268 = arith.addf %175, %267 : vector<128xf32>
    %269 = arith.maximumf %264, %266 : vector<128xf32>
    %270 = arith.maximumf %269, %268 : vector<128xf32>
    %271 = arith.subf %264, %270 : vector<128xf32>
    %272 = math.exp %271 : vector<128xf32>
    %273 = arith.subf %266, %270 : vector<128xf32>
    %274 = math.exp %273 : vector<128xf32>
    %275 = arith.addf %272, %274 : vector<128xf32>
    %276 = arith.subf %268, %270 : vector<128xf32>
    %277 = math.exp %276 : vector<128xf32>
    %278 = arith.addf %275, %277 : vector<128xf32>
    %279 = math.log %278 : vector<128xf32>
    %280 = arith.addf %270, %279 : vector<128xf32>
    %281 = arith.addf %280, %187 : vector<128xf32>
    %282 = vector.broadcast %8 : f32 to vector<128xf32>
    %283 = arith.addf %137, %282 : vector<128xf32>
    %284 = vector.broadcast %11 : f32 to vector<128xf32>
    %285 = arith.addf %156, %284 : vector<128xf32>
    %286 = vector.broadcast %14 : f32 to vector<128xf32>
    %287 = arith.addf %175, %286 : vector<128xf32>
    %288 = arith.maximumf %283, %285 : vector<128xf32>
    %289 = arith.maximumf %288, %287 : vector<128xf32>
    %290 = arith.subf %283, %289 : vector<128xf32>
    %291 = math.exp %290 : vector<128xf32>
    %292 = arith.subf %285, %289 : vector<128xf32>
    %293 = math.exp %292 : vector<128xf32>
    %294 = arith.addf %291, %293 : vector<128xf32>
    %295 = arith.subf %287, %289 : vector<128xf32>
    %296 = math.exp %295 : vector<128xf32>
    %297 = arith.addf %294, %296 : vector<128xf32>
    %298 = math.log %297 : vector<128xf32>
    %299 = arith.addf %289, %298 : vector<128xf32>
    %300 = arith.addf %299, %189 : vector<128xf32>
    %c3 = arith.constant 3 : index
    %c0_93 = arith.constant 0 : index
    %301 = vector.load %arg2[%c3, %c0_93] : memref<8x128xi32, #tpu.memory_space<vmem>>, vector<1x128xi32>
    %302 = vector.shape_cast %301 : vector<1x128xi32> to vector<128xi32>
    %c0_i32_94 = arith.constant 0 : i32
    %303 = vector.broadcast %c0_i32_94 : i32 to vector<128xi32>
    %304 = arith.cmpi eq, %302, %303 : vector<128xi32>
    %c1_i32_95 = arith.constant 1 : i32
    %305 = vector.broadcast %c1_i32_95 : i32 to vector<128xi32>
    %306 = arith.cmpi eq, %302, %305 : vector<128xi32>
    %c2_i32_96 = arith.constant 2 : i32
    %307 = vector.broadcast %c2_i32_96 : i32 to vector<128xi32>
    %308 = arith.cmpi eq, %302, %307 : vector<128xi32>
    %c3_97 = arith.constant 3 : index
    %c0_98 = arith.constant 0 : index
    %c0_99 = arith.constant 0 : index
    %309 = vector.load %arg1[%c3_97, %c0_98, %c0_99] : memref<8x3x128xf32, #tpu.memory_space<vmem>>, vector<1x1x128xf32>
    %310 = vector.shape_cast %309 : vector<1x1x128xf32> to vector<128xf32>
    %c3_100 = arith.constant 3 : index
    %c1_101 = arith.constant 1 : index
    %c0_102 = arith.constant 0 : index
    %311 = vector.load %arg1[%c3_100, %c1_101, %c0_102] : memref<8x3x128xf32, #tpu.memory_space<vmem>>, vector<1x1x128xf32>
    %312 = vector.shape_cast %311 : vector<1x1x128xf32> to vector<128xf32>
    %c3_103 = arith.constant 3 : index
    %c2_104 = arith.constant 2 : index
    %c0_105 = arith.constant 0 : index
    %313 = vector.load %arg1[%c3_103, %c2_104, %c0_105] : memref<8x3x128xf32, #tpu.memory_space<vmem>>, vector<1x1x128xf32>
    %314 = vector.shape_cast %313 : vector<1x1x128xf32> to vector<128xf32>
    %cst_106 = arith.constant 0.000000e+00 : f32
    %315 = vector.broadcast %cst_106 : f32 to vector<128xf32>
    %316 = arith.select %304, %310, %315 : vector<128xi1>, vector<128xf32>
    %317 = arith.addf %243, %316 : vector<128xf32>
    %318 = arith.andi %179, %304 : vector<128xi1>
    %cst_107 = arith.constant 0.000000e+00 : f32
    %319 = vector.broadcast %6 : f32 to vector<128xf32>
    %320 = vector.broadcast %cst_107 : f32 to vector<128xf32>
    %321 = arith.select %318, %319, %320 : vector<128xi1>, vector<128xf32>
    %322 = arith.addf %317, %321 : vector<128xf32>
    %323 = arith.andi %181, %304 : vector<128xi1>
    %cst_108 = arith.constant 0.000000e+00 : f32
    %324 = vector.broadcast %9 : f32 to vector<128xf32>
    %325 = vector.broadcast %cst_108 : f32 to vector<128xf32>
    %326 = arith.select %323, %324, %325 : vector<128xi1>, vector<128xf32>
    %327 = arith.addf %322, %326 : vector<128xf32>
    %328 = arith.andi %183, %304 : vector<128xi1>
    %cst_109 = arith.constant 0.000000e+00 : f32
    %329 = vector.broadcast %12 : f32 to vector<128xf32>
    %330 = vector.broadcast %cst_109 : f32 to vector<128xf32>
    %331 = arith.select %328, %329, %330 : vector<128xi1>, vector<128xf32>
    %332 = arith.addf %327, %331 : vector<128xf32>
    %cst_110 = arith.constant 0.000000e+00 : f32
    %333 = vector.broadcast %cst_110 : f32 to vector<128xf32>
    %334 = arith.select %306, %312, %333 : vector<128xi1>, vector<128xf32>
    %335 = arith.addf %332, %334 : vector<128xf32>
    %336 = arith.andi %179, %306 : vector<128xi1>
    %cst_111 = arith.constant 0.000000e+00 : f32
    %337 = vector.broadcast %7 : f32 to vector<128xf32>
    %338 = vector.broadcast %cst_111 : f32 to vector<128xf32>
    %339 = arith.select %336, %337, %338 : vector<128xi1>, vector<128xf32>
    %340 = arith.addf %335, %339 : vector<128xf32>
    %341 = arith.andi %181, %306 : vector<128xi1>
    %cst_112 = arith.constant 0.000000e+00 : f32
    %342 = vector.broadcast %10 : f32 to vector<128xf32>
    %343 = vector.broadcast %cst_112 : f32 to vector<128xf32>
    %344 = arith.select %341, %342, %343 : vector<128xi1>, vector<128xf32>
    %345 = arith.addf %340, %344 : vector<128xf32>
    %346 = arith.andi %183, %306 : vector<128xi1>
    %cst_113 = arith.constant 0.000000e+00 : f32
    %347 = vector.broadcast %13 : f32 to vector<128xf32>
    %348 = vector.broadcast %cst_113 : f32 to vector<128xf32>
    %349 = arith.select %346, %347, %348 : vector<128xi1>, vector<128xf32>
    %350 = arith.addf %345, %349 : vector<128xf32>
    %cst_114 = arith.constant 0.000000e+00 : f32
    %351 = vector.broadcast %cst_114 : f32 to vector<128xf32>
    %352 = arith.select %308, %314, %351 : vector<128xi1>, vector<128xf32>
    %353 = arith.addf %350, %352 : vector<128xf32>
    %354 = arith.andi %179, %308 : vector<128xi1>
    %cst_115 = arith.constant 0.000000e+00 : f32
    %355 = vector.broadcast %8 : f32 to vector<128xf32>
    %356 = vector.broadcast %cst_115 : f32 to vector<128xf32>
    %357 = arith.select %354, %355, %356 : vector<128xi1>, vector<128xf32>
    %358 = arith.addf %353, %357 : vector<128xf32>
    %359 = arith.andi %181, %308 : vector<128xi1>
    %cst_116 = arith.constant 0.000000e+00 : f32
    %360 = vector.broadcast %11 : f32 to vector<128xf32>
    %361 = vector.broadcast %cst_116 : f32 to vector<128xf32>
    %362 = arith.select %359, %360, %361 : vector<128xi1>, vector<128xf32>
    %363 = arith.addf %358, %362 : vector<128xf32>
    %364 = arith.andi %183, %308 : vector<128xi1>
    %cst_117 = arith.constant 0.000000e+00 : f32
    %365 = vector.broadcast %14 : f32 to vector<128xf32>
    %366 = vector.broadcast %cst_117 : f32 to vector<128xf32>
    %367 = arith.select %364, %365, %366 : vector<128xi1>, vector<128xf32>
    %368 = arith.addf %363, %367 : vector<128xf32>
    %369 = vector.broadcast %6 : f32 to vector<128xf32>
    %370 = arith.addf %262, %369 : vector<128xf32>
    %371 = vector.broadcast %9 : f32 to vector<128xf32>
    %372 = arith.addf %281, %371 : vector<128xf32>
    %373 = vector.broadcast %12 : f32 to vector<128xf32>
    %374 = arith.addf %300, %373 : vector<128xf32>
    %375 = arith.maximumf %370, %372 : vector<128xf32>
    %376 = arith.maximumf %375, %374 : vector<128xf32>
    %377 = arith.subf %370, %376 : vector<128xf32>
    %378 = math.exp %377 : vector<128xf32>
    %379 = arith.subf %372, %376 : vector<128xf32>
    %380 = math.exp %379 : vector<128xf32>
    %381 = arith.addf %378, %380 : vector<128xf32>
    %382 = arith.subf %374, %376 : vector<128xf32>
    %383 = math.exp %382 : vector<128xf32>
    %384 = arith.addf %381, %383 : vector<128xf32>
    %385 = math.log %384 : vector<128xf32>
    %386 = arith.addf %376, %385 : vector<128xf32>
    %387 = arith.addf %386, %310 : vector<128xf32>
    %388 = vector.broadcast %7 : f32 to vector<128xf32>
    %389 = arith.addf %262, %388 : vector<128xf32>
    %390 = vector.broadcast %10 : f32 to vector<128xf32>
    %391 = arith.addf %281, %390 : vector<128xf32>
    %392 = vector.broadcast %13 : f32 to vector<128xf32>
    %393 = arith.addf %300, %392 : vector<128xf32>
    %394 = arith.maximumf %389, %391 : vector<128xf32>
    %395 = arith.maximumf %394, %393 : vector<128xf32>
    %396 = arith.subf %389, %395 : vector<128xf32>
    %397 = math.exp %396 : vector<128xf32>
    %398 = arith.subf %391, %395 : vector<128xf32>
    %399 = math.exp %398 : vector<128xf32>
    %400 = arith.addf %397, %399 : vector<128xf32>
    %401 = arith.subf %393, %395 : vector<128xf32>
    %402 = math.exp %401 : vector<128xf32>
    %403 = arith.addf %400, %402 : vector<128xf32>
    %404 = math.log %403 : vector<128xf32>
    %405 = arith.addf %395, %404 : vector<128xf32>
    %406 = arith.addf %405, %312 : vector<128xf32>
    %407 = vector.broadcast %8 : f32 to vector<128xf32>
    %408 = arith.addf %262, %407 : vector<128xf32>
    %409 = vector.broadcast %11 : f32 to vector<128xf32>
    %410 = arith.addf %281, %409 : vector<128xf32>
    %411 = vector.broadcast %14 : f32 to vector<128xf32>
    %412 = arith.addf %300, %411 : vector<128xf32>
    %413 = arith.maximumf %408, %410 : vector<128xf32>
    %414 = arith.maximumf %413, %412 : vector<128xf32>
    %415 = arith.subf %408, %414 : vector<128xf32>
    %416 = math.exp %415 : vector<128xf32>
    %417 = arith.subf %410, %414 : vector<128xf32>
    %418 = math.exp %417 : vector<128xf32>
    %419 = arith.addf %416, %418 : vector<128xf32>
    %420 = arith.subf %412, %414 : vector<128xf32>
    %421 = math.exp %420 : vector<128xf32>
    %422 = arith.addf %419, %421 : vector<128xf32>
    %423 = math.log %422 : vector<128xf32>
    %424 = arith.addf %414, %423 : vector<128xf32>
    %425 = arith.addf %424, %314 : vector<128xf32>
    %c4 = arith.constant 4 : index
    %c0_118 = arith.constant 0 : index
    %426 = vector.load %arg2[%c4, %c0_118] : memref<8x128xi32, #tpu.memory_space<vmem>>, vector<1x128xi32>
    %427 = vector.shape_cast %426 : vector<1x128xi32> to vector<128xi32>
    %c0_i32_119 = arith.constant 0 : i32
    %428 = vector.broadcast %c0_i32_119 : i32 to vector<128xi32>
    %429 = arith.cmpi eq, %427, %428 : vector<128xi32>
    %c1_i32_120 = arith.constant 1 : i32
    %430 = vector.broadcast %c1_i32_120 : i32 to vector<128xi32>
    %431 = arith.cmpi eq, %427, %430 : vector<128xi32>
    %c2_i32_121 = arith.constant 2 : i32
    %432 = vector.broadcast %c2_i32_121 : i32 to vector<128xi32>
    %433 = arith.cmpi eq, %427, %432 : vector<128xi32>
    %c4_122 = arith.constant 4 : index
    %c0_123 = arith.constant 0 : index
    %c0_124 = arith.constant 0 : index
    %434 = vector.load %arg1[%c4_122, %c0_123, %c0_124] : memref<8x3x128xf32, #tpu.memory_space<vmem>>, vector<1x1x128xf32>
    %435 = vector.shape_cast %434 : vector<1x1x128xf32> to vector<128xf32>
    %c4_125 = arith.constant 4 : index
    %c1_126 = arith.constant 1 : index
    %c0_127 = arith.constant 0 : index
    %436 = vector.load %arg1[%c4_125, %c1_126, %c0_127] : memref<8x3x128xf32, #tpu.memory_space<vmem>>, vector<1x1x128xf32>
    %437 = vector.shape_cast %436 : vector<1x1x128xf32> to vector<128xf32>
    %c4_128 = arith.constant 4 : index
    %c2_129 = arith.constant 2 : index
    %c0_130 = arith.constant 0 : index
    %438 = vector.load %arg1[%c4_128, %c2_129, %c0_130] : memref<8x3x128xf32, #tpu.memory_space<vmem>>, vector<1x1x128xf32>
    %439 = vector.shape_cast %438 : vector<1x1x128xf32> to vector<128xf32>
    %cst_131 = arith.constant 0.000000e+00 : f32
    %440 = vector.broadcast %cst_131 : f32 to vector<128xf32>
    %441 = arith.select %429, %435, %440 : vector<128xi1>, vector<128xf32>
    %442 = arith.addf %368, %441 : vector<128xf32>
    %443 = arith.andi %304, %429 : vector<128xi1>
    %cst_132 = arith.constant 0.000000e+00 : f32
    %444 = vector.broadcast %6 : f32 to vector<128xf32>
    %445 = vector.broadcast %cst_132 : f32 to vector<128xf32>
    %446 = arith.select %443, %444, %445 : vector<128xi1>, vector<128xf32>
    %447 = arith.addf %442, %446 : vector<128xf32>
    %448 = arith.andi %306, %429 : vector<128xi1>
    %cst_133 = arith.constant 0.000000e+00 : f32
    %449 = vector.broadcast %9 : f32 to vector<128xf32>
    %450 = vector.broadcast %cst_133 : f32 to vector<128xf32>
    %451 = arith.select %448, %449, %450 : vector<128xi1>, vector<128xf32>
    %452 = arith.addf %447, %451 : vector<128xf32>
    %453 = arith.andi %308, %429 : vector<128xi1>
    %cst_134 = arith.constant 0.000000e+00 : f32
    %454 = vector.broadcast %12 : f32 to vector<128xf32>
    %455 = vector.broadcast %cst_134 : f32 to vector<128xf32>
    %456 = arith.select %453, %454, %455 : vector<128xi1>, vector<128xf32>
    %457 = arith.addf %452, %456 : vector<128xf32>
    %cst_135 = arith.constant 0.000000e+00 : f32
    %458 = vector.broadcast %cst_135 : f32 to vector<128xf32>
    %459 = arith.select %431, %437, %458 : vector<128xi1>, vector<128xf32>
    %460 = arith.addf %457, %459 : vector<128xf32>
    %461 = arith.andi %304, %431 : vector<128xi1>
    %cst_136 = arith.constant 0.000000e+00 : f32
    %462 = vector.broadcast %7 : f32 to vector<128xf32>
    %463 = vector.broadcast %cst_136 : f32 to vector<128xf32>
    %464 = arith.select %461, %462, %463 : vector<128xi1>, vector<128xf32>
    %465 = arith.addf %460, %464 : vector<128xf32>
    %466 = arith.andi %306, %431 : vector<128xi1>
    %cst_137 = arith.constant 0.000000e+00 : f32
    %467 = vector.broadcast %10 : f32 to vector<128xf32>
    %468 = vector.broadcast %cst_137 : f32 to vector<128xf32>
    %469 = arith.select %466, %467, %468 : vector<128xi1>, vector<128xf32>
    %470 = arith.addf %465, %469 : vector<128xf32>
    %471 = arith.andi %308, %431 : vector<128xi1>
    %cst_138 = arith.constant 0.000000e+00 : f32
    %472 = vector.broadcast %13 : f32 to vector<128xf32>
    %473 = vector.broadcast %cst_138 : f32 to vector<128xf32>
    %474 = arith.select %471, %472, %473 : vector<128xi1>, vector<128xf32>
    %475 = arith.addf %470, %474 : vector<128xf32>
    %cst_139 = arith.constant 0.000000e+00 : f32
    %476 = vector.broadcast %cst_139 : f32 to vector<128xf32>
    %477 = arith.select %433, %439, %476 : vector<128xi1>, vector<128xf32>
    %478 = arith.addf %475, %477 : vector<128xf32>
    %479 = arith.andi %304, %433 : vector<128xi1>
    %cst_140 = arith.constant 0.000000e+00 : f32
    %480 = vector.broadcast %8 : f32 to vector<128xf32>
    %481 = vector.broadcast %cst_140 : f32 to vector<128xf32>
    %482 = arith.select %479, %480, %481 : vector<128xi1>, vector<128xf32>
    %483 = arith.addf %478, %482 : vector<128xf32>
    %484 = arith.andi %306, %433 : vector<128xi1>
    %cst_141 = arith.constant 0.000000e+00 : f32
    %485 = vector.broadcast %11 : f32 to vector<128xf32>
    %486 = vector.broadcast %cst_141 : f32 to vector<128xf32>
    %487 = arith.select %484, %485, %486 : vector<128xi1>, vector<128xf32>
    %488 = arith.addf %483, %487 : vector<128xf32>
    %489 = arith.andi %308, %433 : vector<128xi1>
    %cst_142 = arith.constant 0.000000e+00 : f32
    %490 = vector.broadcast %14 : f32 to vector<128xf32>
    %491 = vector.broadcast %cst_142 : f32 to vector<128xf32>
    %492 = arith.select %489, %490, %491 : vector<128xi1>, vector<128xf32>
    %493 = arith.addf %488, %492 : vector<128xf32>
    %494 = vector.broadcast %6 : f32 to vector<128xf32>
    %495 = arith.addf %387, %494 : vector<128xf32>
    %496 = vector.broadcast %9 : f32 to vector<128xf32>
    %497 = arith.addf %406, %496 : vector<128xf32>
    %498 = vector.broadcast %12 : f32 to vector<128xf32>
    %499 = arith.addf %425, %498 : vector<128xf32>
    %500 = arith.maximumf %495, %497 : vector<128xf32>
    %501 = arith.maximumf %500, %499 : vector<128xf32>
    %502 = arith.subf %495, %501 : vector<128xf32>
    %503 = math.exp %502 : vector<128xf32>
    %504 = arith.subf %497, %501 : vector<128xf32>
    %505 = math.exp %504 : vector<128xf32>
    %506 = arith.addf %503, %505 : vector<128xf32>
    %507 = arith.subf %499, %501 : vector<128xf32>
    %508 = math.exp %507 : vector<128xf32>
    %509 = arith.addf %506, %508 : vector<128xf32>
    %510 = math.log %509 : vector<128xf32>
    %511 = arith.addf %501, %510 : vector<128xf32>
    %512 = arith.addf %511, %435 : vector<128xf32>
    %513 = vector.broadcast %7 : f32 to vector<128xf32>
    %514 = arith.addf %387, %513 : vector<128xf32>
    %515 = vector.broadcast %10 : f32 to vector<128xf32>
    %516 = arith.addf %406, %515 : vector<128xf32>
    %517 = vector.broadcast %13 : f32 to vector<128xf32>
    %518 = arith.addf %425, %517 : vector<128xf32>
    %519 = arith.maximumf %514, %516 : vector<128xf32>
    %520 = arith.maximumf %519, %518 : vector<128xf32>
    %521 = arith.subf %514, %520 : vector<128xf32>
    %522 = math.exp %521 : vector<128xf32>
    %523 = arith.subf %516, %520 : vector<128xf32>
    %524 = math.exp %523 : vector<128xf32>
    %525 = arith.addf %522, %524 : vector<128xf32>
    %526 = arith.subf %518, %520 : vector<128xf32>
    %527 = math.exp %526 : vector<128xf32>
    %528 = arith.addf %525, %527 : vector<128xf32>
    %529 = math.log %528 : vector<128xf32>
    %530 = arith.addf %520, %529 : vector<128xf32>
    %531 = arith.addf %530, %437 : vector<128xf32>
    %532 = vector.broadcast %8 : f32 to vector<128xf32>
    %533 = arith.addf %387, %532 : vector<128xf32>
    %534 = vector.broadcast %11 : f32 to vector<128xf32>
    %535 = arith.addf %406, %534 : vector<128xf32>
    %536 = vector.broadcast %14 : f32 to vector<128xf32>
    %537 = arith.addf %425, %536 : vector<128xf32>
    %538 = arith.maximumf %533, %535 : vector<128xf32>
    %539 = arith.maximumf %538, %537 : vector<128xf32>
    %540 = arith.subf %533, %539 : vector<128xf32>
    %541 = math.exp %540 : vector<128xf32>
    %542 = arith.subf %535, %539 : vector<128xf32>
    %543 = math.exp %542 : vector<128xf32>
    %544 = arith.addf %541, %543 : vector<128xf32>
    %545 = arith.subf %537, %539 : vector<128xf32>
    %546 = math.exp %545 : vector<128xf32>
    %547 = arith.addf %544, %546 : vector<128xf32>
    %548 = math.log %547 : vector<128xf32>
    %549 = arith.addf %539, %548 : vector<128xf32>
    %550 = arith.addf %549, %439 : vector<128xf32>
    %c5 = arith.constant 5 : index
    %c0_143 = arith.constant 0 : index
    %551 = vector.load %arg2[%c5, %c0_143] : memref<8x128xi32, #tpu.memory_space<vmem>>, vector<1x128xi32>
    %552 = vector.shape_cast %551 : vector<1x128xi32> to vector<128xi32>
    %c0_i32_144 = arith.constant 0 : i32
    %553 = vector.broadcast %c0_i32_144 : i32 to vector<128xi32>
    %554 = arith.cmpi eq, %552, %553 : vector<128xi32>
    %c1_i32_145 = arith.constant 1 : i32
    %555 = vector.broadcast %c1_i32_145 : i32 to vector<128xi32>
    %556 = arith.cmpi eq, %552, %555 : vector<128xi32>
    %c2_i32_146 = arith.constant 2 : i32
    %557 = vector.broadcast %c2_i32_146 : i32 to vector<128xi32>
    %558 = arith.cmpi eq, %552, %557 : vector<128xi32>
    %c5_147 = arith.constant 5 : index
    %c0_148 = arith.constant 0 : index
    %c0_149 = arith.constant 0 : index
    %559 = vector.load %arg1[%c5_147, %c0_148, %c0_149] : memref<8x3x128xf32, #tpu.memory_space<vmem>>, vector<1x1x128xf32>
    %560 = vector.shape_cast %559 : vector<1x1x128xf32> to vector<128xf32>
    %c5_150 = arith.constant 5 : index
    %c1_151 = arith.constant 1 : index
    %c0_152 = arith.constant 0 : index
    %561 = vector.load %arg1[%c5_150, %c1_151, %c0_152] : memref<8x3x128xf32, #tpu.memory_space<vmem>>, vector<1x1x128xf32>
    %562 = vector.shape_cast %561 : vector<1x1x128xf32> to vector<128xf32>
    %c5_153 = arith.constant 5 : index
    %c2_154 = arith.constant 2 : index
    %c0_155 = arith.constant 0 : index
    %563 = vector.load %arg1[%c5_153, %c2_154, %c0_155] : memref<8x3x128xf32, #tpu.memory_space<vmem>>, vector<1x1x128xf32>
    %564 = vector.shape_cast %563 : vector<1x1x128xf32> to vector<128xf32>
    %cst_156 = arith.constant 0.000000e+00 : f32
    %565 = vector.broadcast %cst_156 : f32 to vector<128xf32>
    %566 = arith.select %554, %560, %565 : vector<128xi1>, vector<128xf32>
    %567 = arith.addf %493, %566 : vector<128xf32>
    %568 = arith.andi %429, %554 : vector<128xi1>
    %cst_157 = arith.constant 0.000000e+00 : f32
    %569 = vector.broadcast %6 : f32 to vector<128xf32>
    %570 = vector.broadcast %cst_157 : f32 to vector<128xf32>
    %571 = arith.select %568, %569, %570 : vector<128xi1>, vector<128xf32>
    %572 = arith.addf %567, %571 : vector<128xf32>
    %573 = arith.andi %431, %554 : vector<128xi1>
    %cst_158 = arith.constant 0.000000e+00 : f32
    %574 = vector.broadcast %9 : f32 to vector<128xf32>
    %575 = vector.broadcast %cst_158 : f32 to vector<128xf32>
    %576 = arith.select %573, %574, %575 : vector<128xi1>, vector<128xf32>
    %577 = arith.addf %572, %576 : vector<128xf32>
    %578 = arith.andi %433, %554 : vector<128xi1>
    %cst_159 = arith.constant 0.000000e+00 : f32
    %579 = vector.broadcast %12 : f32 to vector<128xf32>
    %580 = vector.broadcast %cst_159 : f32 to vector<128xf32>
    %581 = arith.select %578, %579, %580 : vector<128xi1>, vector<128xf32>
    %582 = arith.addf %577, %581 : vector<128xf32>
    %cst_160 = arith.constant 0.000000e+00 : f32
    %583 = vector.broadcast %cst_160 : f32 to vector<128xf32>
    %584 = arith.select %556, %562, %583 : vector<128xi1>, vector<128xf32>
    %585 = arith.addf %582, %584 : vector<128xf32>
    %586 = arith.andi %429, %556 : vector<128xi1>
    %cst_161 = arith.constant 0.000000e+00 : f32
    %587 = vector.broadcast %7 : f32 to vector<128xf32>
    %588 = vector.broadcast %cst_161 : f32 to vector<128xf32>
    %589 = arith.select %586, %587, %588 : vector<128xi1>, vector<128xf32>
    %590 = arith.addf %585, %589 : vector<128xf32>
    %591 = arith.andi %431, %556 : vector<128xi1>
    %cst_162 = arith.constant 0.000000e+00 : f32
    %592 = vector.broadcast %10 : f32 to vector<128xf32>
    %593 = vector.broadcast %cst_162 : f32 to vector<128xf32>
    %594 = arith.select %591, %592, %593 : vector<128xi1>, vector<128xf32>
    %595 = arith.addf %590, %594 : vector<128xf32>
    %596 = arith.andi %433, %556 : vector<128xi1>
    %cst_163 = arith.constant 0.000000e+00 : f32
    %597 = vector.broadcast %13 : f32 to vector<128xf32>
    %598 = vector.broadcast %cst_163 : f32 to vector<128xf32>
    %599 = arith.select %596, %597, %598 : vector<128xi1>, vector<128xf32>
    %600 = arith.addf %595, %599 : vector<128xf32>
    %cst_164 = arith.constant 0.000000e+00 : f32
    %601 = vector.broadcast %cst_164 : f32 to vector<128xf32>
    %602 = arith.select %558, %564, %601 : vector<128xi1>, vector<128xf32>
    %603 = arith.addf %600, %602 : vector<128xf32>
    %604 = arith.andi %429, %558 : vector<128xi1>
    %cst_165 = arith.constant 0.000000e+00 : f32
    %605 = vector.broadcast %8 : f32 to vector<128xf32>
    %606 = vector.broadcast %cst_165 : f32 to vector<128xf32>
    %607 = arith.select %604, %605, %606 : vector<128xi1>, vector<128xf32>
    %608 = arith.addf %603, %607 : vector<128xf32>
    %609 = arith.andi %431, %558 : vector<128xi1>
    %cst_166 = arith.constant 0.000000e+00 : f32
    %610 = vector.broadcast %11 : f32 to vector<128xf32>
    %611 = vector.broadcast %cst_166 : f32 to vector<128xf32>
    %612 = arith.select %609, %610, %611 : vector<128xi1>, vector<128xf32>
    %613 = arith.addf %608, %612 : vector<128xf32>
    %614 = arith.andi %433, %558 : vector<128xi1>
    %cst_167 = arith.constant 0.000000e+00 : f32
    %615 = vector.broadcast %14 : f32 to vector<128xf32>
    %616 = vector.broadcast %cst_167 : f32 to vector<128xf32>
    %617 = arith.select %614, %615, %616 : vector<128xi1>, vector<128xf32>
    %618 = arith.addf %613, %617 : vector<128xf32>
    %619 = vector.broadcast %6 : f32 to vector<128xf32>
    %620 = arith.addf %512, %619 : vector<128xf32>
    %621 = vector.broadcast %9 : f32 to vector<128xf32>
    %622 = arith.addf %531, %621 : vector<128xf32>
    %623 = vector.broadcast %12 : f32 to vector<128xf32>
    %624 = arith.addf %550, %623 : vector<128xf32>
    %625 = arith.maximumf %620, %622 : vector<128xf32>
    %626 = arith.maximumf %625, %624 : vector<128xf32>
    %627 = arith.subf %620, %626 : vector<128xf32>
    %628 = math.exp %627 : vector<128xf32>
    %629 = arith.subf %622, %626 : vector<128xf32>
    %630 = math.exp %629 : vector<128xf32>
    %631 = arith.addf %628, %630 : vector<128xf32>
    %632 = arith.subf %624, %626 : vector<128xf32>
    %633 = math.exp %632 : vector<128xf32>
    %634 = arith.addf %631, %633 : vector<128xf32>
    %635 = math.log %634 : vector<128xf32>
    %636 = arith.addf %626, %635 : vector<128xf32>
    %637 = arith.addf %636, %560 : vector<128xf32>
    %638 = vector.broadcast %7 : f32 to vector<128xf32>
    %639 = arith.addf %512, %638 : vector<128xf32>
    %640 = vector.broadcast %10 : f32 to vector<128xf32>
    %641 = arith.addf %531, %640 : vector<128xf32>
    %642 = vector.broadcast %13 : f32 to vector<128xf32>
    %643 = arith.addf %550, %642 : vector<128xf32>
    %644 = arith.maximumf %639, %641 : vector<128xf32>
    %645 = arith.maximumf %644, %643 : vector<128xf32>
    %646 = arith.subf %639, %645 : vector<128xf32>
    %647 = math.exp %646 : vector<128xf32>
    %648 = arith.subf %641, %645 : vector<128xf32>
    %649 = math.exp %648 : vector<128xf32>
    %650 = arith.addf %647, %649 : vector<128xf32>
    %651 = arith.subf %643, %645 : vector<128xf32>
    %652 = math.exp %651 : vector<128xf32>
    %653 = arith.addf %650, %652 : vector<128xf32>
    %654 = math.log %653 : vector<128xf32>
    %655 = arith.addf %645, %654 : vector<128xf32>
    %656 = arith.addf %655, %562 : vector<128xf32>
    %657 = vector.broadcast %8 : f32 to vector<128xf32>
    %658 = arith.addf %512, %657 : vector<128xf32>
    %659 = vector.broadcast %11 : f32 to vector<128xf32>
    %660 = arith.addf %531, %659 : vector<128xf32>
    %661 = vector.broadcast %14 : f32 to vector<128xf32>
    %662 = arith.addf %550, %661 : vector<128xf32>
    %663 = arith.maximumf %658, %660 : vector<128xf32>
    %664 = arith.maximumf %663, %662 : vector<128xf32>
    %665 = arith.subf %658, %664 : vector<128xf32>
    %666 = math.exp %665 : vector<128xf32>
    %667 = arith.subf %660, %664 : vector<128xf32>
    %668 = math.exp %667 : vector<128xf32>
    %669 = arith.addf %666, %668 : vector<128xf32>
    %670 = arith.subf %662, %664 : vector<128xf32>
    %671 = math.exp %670 : vector<128xf32>
    %672 = arith.addf %669, %671 : vector<128xf32>
    %673 = math.log %672 : vector<128xf32>
    %674 = arith.addf %664, %673 : vector<128xf32>
    %675 = arith.addf %674, %564 : vector<128xf32>
    %c6 = arith.constant 6 : index
    %c0_168 = arith.constant 0 : index
    %676 = vector.load %arg2[%c6, %c0_168] : memref<8x128xi32, #tpu.memory_space<vmem>>, vector<1x128xi32>
    %677 = vector.shape_cast %676 : vector<1x128xi32> to vector<128xi32>
    %c0_i32_169 = arith.constant 0 : i32
    %678 = vector.broadcast %c0_i32_169 : i32 to vector<128xi32>
    %679 = arith.cmpi eq, %677, %678 : vector<128xi32>
    %c1_i32_170 = arith.constant 1 : i32
    %680 = vector.broadcast %c1_i32_170 : i32 to vector<128xi32>
    %681 = arith.cmpi eq, %677, %680 : vector<128xi32>
    %c2_i32_171 = arith.constant 2 : i32
    %682 = vector.broadcast %c2_i32_171 : i32 to vector<128xi32>
    %683 = arith.cmpi eq, %677, %682 : vector<128xi32>
    %c6_172 = arith.constant 6 : index
    %c0_173 = arith.constant 0 : index
    %c0_174 = arith.constant 0 : index
    %684 = vector.load %arg1[%c6_172, %c0_173, %c0_174] : memref<8x3x128xf32, #tpu.memory_space<vmem>>, vector<1x1x128xf32>
    %685 = vector.shape_cast %684 : vector<1x1x128xf32> to vector<128xf32>
    %c6_175 = arith.constant 6 : index
    %c1_176 = arith.constant 1 : index
    %c0_177 = arith.constant 0 : index
    %686 = vector.load %arg1[%c6_175, %c1_176, %c0_177] : memref<8x3x128xf32, #tpu.memory_space<vmem>>, vector<1x1x128xf32>
    %687 = vector.shape_cast %686 : vector<1x1x128xf32> to vector<128xf32>
    %c6_178 = arith.constant 6 : index
    %c2_179 = arith.constant 2 : index
    %c0_180 = arith.constant 0 : index
    %688 = vector.load %arg1[%c6_178, %c2_179, %c0_180] : memref<8x3x128xf32, #tpu.memory_space<vmem>>, vector<1x1x128xf32>
    %689 = vector.shape_cast %688 : vector<1x1x128xf32> to vector<128xf32>
    %cst_181 = arith.constant 0.000000e+00 : f32
    %690 = vector.broadcast %cst_181 : f32 to vector<128xf32>
    %691 = arith.select %679, %685, %690 : vector<128xi1>, vector<128xf32>
    %692 = arith.addf %618, %691 : vector<128xf32>
    %693 = arith.andi %554, %679 : vector<128xi1>
    %cst_182 = arith.constant 0.000000e+00 : f32
    %694 = vector.broadcast %6 : f32 to vector<128xf32>
    %695 = vector.broadcast %cst_182 : f32 to vector<128xf32>
    %696 = arith.select %693, %694, %695 : vector<128xi1>, vector<128xf32>
    %697 = arith.addf %692, %696 : vector<128xf32>
    %698 = arith.andi %556, %679 : vector<128xi1>
    %cst_183 = arith.constant 0.000000e+00 : f32
    %699 = vector.broadcast %9 : f32 to vector<128xf32>
    %700 = vector.broadcast %cst_183 : f32 to vector<128xf32>
    %701 = arith.select %698, %699, %700 : vector<128xi1>, vector<128xf32>
    %702 = arith.addf %697, %701 : vector<128xf32>
    %703 = arith.andi %558, %679 : vector<128xi1>
    %cst_184 = arith.constant 0.000000e+00 : f32
    %704 = vector.broadcast %12 : f32 to vector<128xf32>
    %705 = vector.broadcast %cst_184 : f32 to vector<128xf32>
    %706 = arith.select %703, %704, %705 : vector<128xi1>, vector<128xf32>
    %707 = arith.addf %702, %706 : vector<128xf32>
    %cst_185 = arith.constant 0.000000e+00 : f32
    %708 = vector.broadcast %cst_185 : f32 to vector<128xf32>
    %709 = arith.select %681, %687, %708 : vector<128xi1>, vector<128xf32>
    %710 = arith.addf %707, %709 : vector<128xf32>
    %711 = arith.andi %554, %681 : vector<128xi1>
    %cst_186 = arith.constant 0.000000e+00 : f32
    %712 = vector.broadcast %7 : f32 to vector<128xf32>
    %713 = vector.broadcast %cst_186 : f32 to vector<128xf32>
    %714 = arith.select %711, %712, %713 : vector<128xi1>, vector<128xf32>
    %715 = arith.addf %710, %714 : vector<128xf32>
    %716 = arith.andi %556, %681 : vector<128xi1>
    %cst_187 = arith.constant 0.000000e+00 : f32
    %717 = vector.broadcast %10 : f32 to vector<128xf32>
    %718 = vector.broadcast %cst_187 : f32 to vector<128xf32>
    %719 = arith.select %716, %717, %718 : vector<128xi1>, vector<128xf32>
    %720 = arith.addf %715, %719 : vector<128xf32>
    %721 = arith.andi %558, %681 : vector<128xi1>
    %cst_188 = arith.constant 0.000000e+00 : f32
    %722 = vector.broadcast %13 : f32 to vector<128xf32>
    %723 = vector.broadcast %cst_188 : f32 to vector<128xf32>
    %724 = arith.select %721, %722, %723 : vector<128xi1>, vector<128xf32>
    %725 = arith.addf %720, %724 : vector<128xf32>
    %cst_189 = arith.constant 0.000000e+00 : f32
    %726 = vector.broadcast %cst_189 : f32 to vector<128xf32>
    %727 = arith.select %683, %689, %726 : vector<128xi1>, vector<128xf32>
    %728 = arith.addf %725, %727 : vector<128xf32>
    %729 = arith.andi %554, %683 : vector<128xi1>
    %cst_190 = arith.constant 0.000000e+00 : f32
    %730 = vector.broadcast %8 : f32 to vector<128xf32>
    %731 = vector.broadcast %cst_190 : f32 to vector<128xf32>
    %732 = arith.select %729, %730, %731 : vector<128xi1>, vector<128xf32>
    %733 = arith.addf %728, %732 : vector<128xf32>
    %734 = arith.andi %556, %683 : vector<128xi1>
    %cst_191 = arith.constant 0.000000e+00 : f32
    %735 = vector.broadcast %11 : f32 to vector<128xf32>
    %736 = vector.broadcast %cst_191 : f32 to vector<128xf32>
    %737 = arith.select %734, %735, %736 : vector<128xi1>, vector<128xf32>
    %738 = arith.addf %733, %737 : vector<128xf32>
    %739 = arith.andi %558, %683 : vector<128xi1>
    %cst_192 = arith.constant 0.000000e+00 : f32
    %740 = vector.broadcast %14 : f32 to vector<128xf32>
    %741 = vector.broadcast %cst_192 : f32 to vector<128xf32>
    %742 = arith.select %739, %740, %741 : vector<128xi1>, vector<128xf32>
    %743 = arith.addf %738, %742 : vector<128xf32>
    %744 = vector.broadcast %6 : f32 to vector<128xf32>
    %745 = arith.addf %637, %744 : vector<128xf32>
    %746 = vector.broadcast %9 : f32 to vector<128xf32>
    %747 = arith.addf %656, %746 : vector<128xf32>
    %748 = vector.broadcast %12 : f32 to vector<128xf32>
    %749 = arith.addf %675, %748 : vector<128xf32>
    %750 = arith.maximumf %745, %747 : vector<128xf32>
    %751 = arith.maximumf %750, %749 : vector<128xf32>
    %752 = arith.subf %745, %751 : vector<128xf32>
    %753 = math.exp %752 : vector<128xf32>
    %754 = arith.subf %747, %751 : vector<128xf32>
    %755 = math.exp %754 : vector<128xf32>
    %756 = arith.addf %753, %755 : vector<128xf32>
    %757 = arith.subf %749, %751 : vector<128xf32>
    %758 = math.exp %757 : vector<128xf32>
    %759 = arith.addf %756, %758 : vector<128xf32>
    %760 = math.log %759 : vector<128xf32>
    %761 = arith.addf %751, %760 : vector<128xf32>
    %762 = arith.addf %761, %685 : vector<128xf32>
    %763 = vector.broadcast %7 : f32 to vector<128xf32>
    %764 = arith.addf %637, %763 : vector<128xf32>
    %765 = vector.broadcast %10 : f32 to vector<128xf32>
    %766 = arith.addf %656, %765 : vector<128xf32>
    %767 = vector.broadcast %13 : f32 to vector<128xf32>
    %768 = arith.addf %675, %767 : vector<128xf32>
    %769 = arith.maximumf %764, %766 : vector<128xf32>
    %770 = arith.maximumf %769, %768 : vector<128xf32>
    %771 = arith.subf %764, %770 : vector<128xf32>
    %772 = math.exp %771 : vector<128xf32>
    %773 = arith.subf %766, %770 : vector<128xf32>
    %774 = math.exp %773 : vector<128xf32>
    %775 = arith.addf %772, %774 : vector<128xf32>
    %776 = arith.subf %768, %770 : vector<128xf32>
    %777 = math.exp %776 : vector<128xf32>
    %778 = arith.addf %775, %777 : vector<128xf32>
    %779 = math.log %778 : vector<128xf32>
    %780 = arith.addf %770, %779 : vector<128xf32>
    %781 = arith.addf %780, %687 : vector<128xf32>
    %782 = vector.broadcast %8 : f32 to vector<128xf32>
    %783 = arith.addf %637, %782 : vector<128xf32>
    %784 = vector.broadcast %11 : f32 to vector<128xf32>
    %785 = arith.addf %656, %784 : vector<128xf32>
    %786 = vector.broadcast %14 : f32 to vector<128xf32>
    %787 = arith.addf %675, %786 : vector<128xf32>
    %788 = arith.maximumf %783, %785 : vector<128xf32>
    %789 = arith.maximumf %788, %787 : vector<128xf32>
    %790 = arith.subf %783, %789 : vector<128xf32>
    %791 = math.exp %790 : vector<128xf32>
    %792 = arith.subf %785, %789 : vector<128xf32>
    %793 = math.exp %792 : vector<128xf32>
    %794 = arith.addf %791, %793 : vector<128xf32>
    %795 = arith.subf %787, %789 : vector<128xf32>
    %796 = math.exp %795 : vector<128xf32>
    %797 = arith.addf %794, %796 : vector<128xf32>
    %798 = math.log %797 : vector<128xf32>
    %799 = arith.addf %789, %798 : vector<128xf32>
    %800 = arith.addf %799, %689 : vector<128xf32>
    %c7 = arith.constant 7 : index
    %c0_193 = arith.constant 0 : index
    %801 = vector.load %arg2[%c7, %c0_193] : memref<8x128xi32, #tpu.memory_space<vmem>>, vector<1x128xi32>
    %802 = vector.shape_cast %801 : vector<1x128xi32> to vector<128xi32>
    %c0_i32_194 = arith.constant 0 : i32
    %803 = vector.broadcast %c0_i32_194 : i32 to vector<128xi32>
    %804 = arith.cmpi eq, %802, %803 : vector<128xi32>
    %c1_i32_195 = arith.constant 1 : i32
    %805 = vector.broadcast %c1_i32_195 : i32 to vector<128xi32>
    %806 = arith.cmpi eq, %802, %805 : vector<128xi32>
    %c2_i32_196 = arith.constant 2 : i32
    %807 = vector.broadcast %c2_i32_196 : i32 to vector<128xi32>
    %808 = arith.cmpi eq, %802, %807 : vector<128xi32>
    %c7_197 = arith.constant 7 : index
    %c0_198 = arith.constant 0 : index
    %c0_199 = arith.constant 0 : index
    %809 = vector.load %arg1[%c7_197, %c0_198, %c0_199] : memref<8x3x128xf32, #tpu.memory_space<vmem>>, vector<1x1x128xf32>
    %810 = vector.shape_cast %809 : vector<1x1x128xf32> to vector<128xf32>
    %c7_200 = arith.constant 7 : index
    %c1_201 = arith.constant 1 : index
    %c0_202 = arith.constant 0 : index
    %811 = vector.load %arg1[%c7_200, %c1_201, %c0_202] : memref<8x3x128xf32, #tpu.memory_space<vmem>>, vector<1x1x128xf32>
    %812 = vector.shape_cast %811 : vector<1x1x128xf32> to vector<128xf32>
    %c7_203 = arith.constant 7 : index
    %c2_204 = arith.constant 2 : index
    %c0_205 = arith.constant 0 : index
    %813 = vector.load %arg1[%c7_203, %c2_204, %c0_205] : memref<8x3x128xf32, #tpu.memory_space<vmem>>, vector<1x1x128xf32>
    %814 = vector.shape_cast %813 : vector<1x1x128xf32> to vector<128xf32>
    %cst_206 = arith.constant 0.000000e+00 : f32
    %815 = vector.broadcast %cst_206 : f32 to vector<128xf32>
    %816 = arith.select %804, %810, %815 : vector<128xi1>, vector<128xf32>
    %817 = arith.addf %743, %816 : vector<128xf32>
    %818 = arith.andi %679, %804 : vector<128xi1>
    %cst_207 = arith.constant 0.000000e+00 : f32
    %819 = vector.broadcast %6 : f32 to vector<128xf32>
    %820 = vector.broadcast %cst_207 : f32 to vector<128xf32>
    %821 = arith.select %818, %819, %820 : vector<128xi1>, vector<128xf32>
    %822 = arith.addf %817, %821 : vector<128xf32>
    %823 = arith.andi %681, %804 : vector<128xi1>
    %cst_208 = arith.constant 0.000000e+00 : f32
    %824 = vector.broadcast %9 : f32 to vector<128xf32>
    %825 = vector.broadcast %cst_208 : f32 to vector<128xf32>
    %826 = arith.select %823, %824, %825 : vector<128xi1>, vector<128xf32>
    %827 = arith.addf %822, %826 : vector<128xf32>
    %828 = arith.andi %683, %804 : vector<128xi1>
    %cst_209 = arith.constant 0.000000e+00 : f32
    %829 = vector.broadcast %12 : f32 to vector<128xf32>
    %830 = vector.broadcast %cst_209 : f32 to vector<128xf32>
    %831 = arith.select %828, %829, %830 : vector<128xi1>, vector<128xf32>
    %832 = arith.addf %827, %831 : vector<128xf32>
    %cst_210 = arith.constant 0.000000e+00 : f32
    %833 = vector.broadcast %cst_210 : f32 to vector<128xf32>
    %834 = arith.select %806, %812, %833 : vector<128xi1>, vector<128xf32>
    %835 = arith.addf %832, %834 : vector<128xf32>
    %836 = arith.andi %679, %806 : vector<128xi1>
    %cst_211 = arith.constant 0.000000e+00 : f32
    %837 = vector.broadcast %7 : f32 to vector<128xf32>
    %838 = vector.broadcast %cst_211 : f32 to vector<128xf32>
    %839 = arith.select %836, %837, %838 : vector<128xi1>, vector<128xf32>
    %840 = arith.addf %835, %839 : vector<128xf32>
    %841 = arith.andi %681, %806 : vector<128xi1>
    %cst_212 = arith.constant 0.000000e+00 : f32
    %842 = vector.broadcast %10 : f32 to vector<128xf32>
    %843 = vector.broadcast %cst_212 : f32 to vector<128xf32>
    %844 = arith.select %841, %842, %843 : vector<128xi1>, vector<128xf32>
    %845 = arith.addf %840, %844 : vector<128xf32>
    %846 = arith.andi %683, %806 : vector<128xi1>
    %cst_213 = arith.constant 0.000000e+00 : f32
    %847 = vector.broadcast %13 : f32 to vector<128xf32>
    %848 = vector.broadcast %cst_213 : f32 to vector<128xf32>
    %849 = arith.select %846, %847, %848 : vector<128xi1>, vector<128xf32>
    %850 = arith.addf %845, %849 : vector<128xf32>
    %cst_214 = arith.constant 0.000000e+00 : f32
    %851 = vector.broadcast %cst_214 : f32 to vector<128xf32>
    %852 = arith.select %808, %814, %851 : vector<128xi1>, vector<128xf32>
    %853 = arith.addf %850, %852 : vector<128xf32>
    %854 = arith.andi %679, %808 : vector<128xi1>
    %cst_215 = arith.constant 0.000000e+00 : f32
    %855 = vector.broadcast %8 : f32 to vector<128xf32>
    %856 = vector.broadcast %cst_215 : f32 to vector<128xf32>
    %857 = arith.select %854, %855, %856 : vector<128xi1>, vector<128xf32>
    %858 = arith.addf %853, %857 : vector<128xf32>
    %859 = arith.andi %681, %808 : vector<128xi1>
    %cst_216 = arith.constant 0.000000e+00 : f32
    %860 = vector.broadcast %11 : f32 to vector<128xf32>
    %861 = vector.broadcast %cst_216 : f32 to vector<128xf32>
    %862 = arith.select %859, %860, %861 : vector<128xi1>, vector<128xf32>
    %863 = arith.addf %858, %862 : vector<128xf32>
    %864 = arith.andi %683, %808 : vector<128xi1>
    %cst_217 = arith.constant 0.000000e+00 : f32
    %865 = vector.broadcast %14 : f32 to vector<128xf32>
    %866 = vector.broadcast %cst_217 : f32 to vector<128xf32>
    %867 = arith.select %864, %865, %866 : vector<128xi1>, vector<128xf32>
    %868 = arith.addf %863, %867 : vector<128xf32>
    %869 = vector.broadcast %6 : f32 to vector<128xf32>
    %870 = arith.addf %762, %869 : vector<128xf32>
    %871 = vector.broadcast %9 : f32 to vector<128xf32>
    %872 = arith.addf %781, %871 : vector<128xf32>
    %873 = vector.broadcast %12 : f32 to vector<128xf32>
    %874 = arith.addf %800, %873 : vector<128xf32>
    %875 = arith.maximumf %870, %872 : vector<128xf32>
    %876 = arith.maximumf %875, %874 : vector<128xf32>
    %877 = arith.subf %870, %876 : vector<128xf32>
    %878 = math.exp %877 : vector<128xf32>
    %879 = arith.subf %872, %876 : vector<128xf32>
    %880 = math.exp %879 : vector<128xf32>
    %881 = arith.addf %878, %880 : vector<128xf32>
    %882 = arith.subf %874, %876 : vector<128xf32>
    %883 = math.exp %882 : vector<128xf32>
    %884 = arith.addf %881, %883 : vector<128xf32>
    %885 = math.log %884 : vector<128xf32>
    %886 = arith.addf %876, %885 : vector<128xf32>
    %887 = arith.addf %886, %810 : vector<128xf32>
    %888 = vector.broadcast %7 : f32 to vector<128xf32>
    %889 = arith.addf %762, %888 : vector<128xf32>
    %890 = vector.broadcast %10 : f32 to vector<128xf32>
    %891 = arith.addf %781, %890 : vector<128xf32>
    %892 = vector.broadcast %13 : f32 to vector<128xf32>
    %893 = arith.addf %800, %892 : vector<128xf32>
    %894 = arith.maximumf %889, %891 : vector<128xf32>
    %895 = arith.maximumf %894, %893 : vector<128xf32>
    %896 = arith.subf %889, %895 : vector<128xf32>
    %897 = math.exp %896 : vector<128xf32>
    %898 = arith.subf %891, %895 : vector<128xf32>
    %899 = math.exp %898 : vector<128xf32>
    %900 = arith.addf %897, %899 : vector<128xf32>
    %901 = arith.subf %893, %895 : vector<128xf32>
    %902 = math.exp %901 : vector<128xf32>
    %903 = arith.addf %900, %902 : vector<128xf32>
    %904 = math.log %903 : vector<128xf32>
    %905 = arith.addf %895, %904 : vector<128xf32>
    %906 = arith.addf %905, %812 : vector<128xf32>
    %907 = vector.broadcast %8 : f32 to vector<128xf32>
    %908 = arith.addf %762, %907 : vector<128xf32>
    %909 = vector.broadcast %11 : f32 to vector<128xf32>
    %910 = arith.addf %781, %909 : vector<128xf32>
    %911 = vector.broadcast %14 : f32 to vector<128xf32>
    %912 = arith.addf %800, %911 : vector<128xf32>
    %913 = arith.maximumf %908, %910 : vector<128xf32>
    %914 = arith.maximumf %913, %912 : vector<128xf32>
    %915 = arith.subf %908, %914 : vector<128xf32>
    %916 = math.exp %915 : vector<128xf32>
    %917 = arith.subf %910, %914 : vector<128xf32>
    %918 = math.exp %917 : vector<128xf32>
    %919 = arith.addf %916, %918 : vector<128xf32>
    %920 = arith.subf %912, %914 : vector<128xf32>
    %921 = math.exp %920 : vector<128xf32>
    %922 = arith.addf %919, %921 : vector<128xf32>
    %923 = math.log %922 : vector<128xf32>
    %924 = arith.addf %914, %923 : vector<128xf32>
    %925 = arith.addf %924, %814 : vector<128xf32>
    %cst_218 = arith.constant 0.000000e+00 : f32
    %926 = vector.broadcast %3 : f32 to vector<128xf32>
    %927 = vector.broadcast %cst_218 : f32 to vector<128xf32>
    %928 = arith.select %804, %926, %927 : vector<128xi1>, vector<128xf32>
    %929 = arith.addf %868, %928 : vector<128xf32>
    %cst_219 = arith.constant 0.000000e+00 : f32
    %930 = vector.broadcast %4 : f32 to vector<128xf32>
    %931 = vector.broadcast %cst_219 : f32 to vector<128xf32>
    %932 = arith.select %806, %930, %931 : vector<128xi1>, vector<128xf32>
    %933 = arith.addf %929, %932 : vector<128xf32>
    %cst_220 = arith.constant 0.000000e+00 : f32
    %934 = vector.broadcast %5 : f32 to vector<128xf32>
    %935 = vector.broadcast %cst_220 : f32 to vector<128xf32>
    %936 = arith.select %808, %934, %935 : vector<128xi1>, vector<128xf32>
    %937 = arith.addf %933, %936 : vector<128xf32>
    %938 = vector.broadcast %3 : f32 to vector<128xf32>
    %939 = arith.addf %887, %938 : vector<128xf32>
    %940 = vector.broadcast %4 : f32 to vector<128xf32>
    %941 = arith.addf %906, %940 : vector<128xf32>
    %942 = vector.broadcast %5 : f32 to vector<128xf32>
    %943 = arith.addf %925, %942 : vector<128xf32>
    %944 = arith.maximumf %939, %941 : vector<128xf32>
    %945 = arith.maximumf %944, %943 : vector<128xf32>
    %946 = arith.subf %939, %945 : vector<128xf32>
    %947 = math.exp %946 : vector<128xf32>
    %948 = arith.subf %941, %945 : vector<128xf32>
    %949 = math.exp %948 : vector<128xf32>
    %950 = arith.addf %947, %949 : vector<128xf32>
    %951 = arith.subf %943, %945 : vector<128xf32>
    %952 = math.exp %951 : vector<128xf32>
    %953 = arith.addf %950, %952 : vector<128xf32>
    %954 = math.log %953 : vector<128xf32>
    %955 = arith.addf %945, %954 : vector<128xf32>
    %956 = arith.subf %937, %955 : vector<128xf32>
    %c0_221 = arith.constant 0 : index
    %c0_222 = arith.constant 0 : index
    %957 = vector.load %arg6[%c0_221, %c0_222] : memref<1x128xf32, #tpu.memory_space<vmem>>, vector<1x128xf32>
    %958 = vector.shape_cast %957 : vector<1x128xf32> to vector<128xf32>
    %959 = vector.shape_cast %956 : vector<128xf32> to vector<1x128xf32>
    tpu.vector_store %arg6[%c0_221, %c0_222], %959 {strides = array<i32>} : memref<1x128xf32, #tpu.memory_space<vmem>>, vector<1x128xf32>,
    return
  }
  func.func @transform_0(%arg0: i32) -> (i32, i32, i32) {
    %c0_i32 = arith.constant 0 : i32
    %c0_i32_0 = arith.constant 0 : i32
    %c0_i32_1 = arith.constant 0 : i32
    return %c0_i32, %c0_i32_0, %arg0 : i32, i32, i32
  }
  func.func @transform_1(%arg0: i32) -> (i32, i32) {
    %c0_i32 = arith.constant 0 : i32
    %c0_i32_0 = arith.constant 0 : i32
    return %c0_i32, %arg0 : i32, i32
  }
  func.func @transform_2(%arg0: i32) -> (i32, i32) {
    %c0_i32 = arith.constant 0 : i32
    %c0_i32_0 = arith.constant 0 : i32
    %c0_i32_1 = arith.constant 0 : i32
    return %c0_i32, %c0_i32_0 : i32, i32
  }
  func.func @transform_3(%arg0: i32) -> (i32, i32) {
    %c0_i32 = arith.constant 0 : i32
    %c0_i32_0 = arith.constant 0 : i32
    %c0_i32_1 = arith.constant 0 : i32
    return %c0_i32, %c0_i32_0 : i32, i32
  }
  func.func @transform_4(%arg0: i32) -> (i32, i32) {
    %c0_i32 = arith.constant 0 : i32
    %c0_i32_0 = arith.constant 0 : i32
    %c0_i32_1 = arith.constant 0 : i32
    return %c0_i32, %c0_i32_0 : i32, i32
  }
  func.func @transform_5(%arg0: i32) -> (i32, i32) {
    %c0_i32 = arith.constant 0 : i32
    %c0_i32_0 = arith.constant 0 : i32
    return %c0_i32, %arg0 : i32, i32
  }
}

</mosaic_0001>

<llo_original>
// kernel: tpu_custom_call.1
$region0: #{tpu_custom_call.1}
  #allocation0 [shape = 'u32[]', space=smem, size = 0x4, offset = 0x4, fixed_abs, tag = 'smem constant byte address 0x4 - core index']
  #allocation1 [shape = 'u32[144,128]{1,0:T(1,128)}', space=vmem, size = 0x12000, scoped, tag = 'internal scratch']
  %s0 = inlined_call_operand.vmem [shape: f32[8,3,128], index: 0, kind: input, shape index: {}]
  %s1 = inlined_call_operand.vmem [shape: s32[8,128], index: 1, kind: input, shape index: {}]
  %s2 = inlined_call_operand.vmem [shape: f32[1,3], index: 2, kind: input, shape index: {}]
  %s3 = inlined_call_operand.vmem [shape: f32[1,3], index: 3, kind: input, shape index: {}]
  %s4 = inlined_call_operand.vmem [shape: f32[3,3], index: 4, kind: input, shape index: {}]
  %s5 = inlined_call_operand.hbm [shape: f32[1,128], index: 5, kind: output, shape index: {}]
  %s6 = sld [smem:[#allocation0]]
  $region42: #{tpu_custom_call.1} parent=0
    _
  %s8 = ssub.s32 1, %s6
  %s9 = scalar_select 0, %s8, %s6
  $region1: #{tpu_custom_call.1} parent=0
    #allocation2 [shape = 'u8[512]{0}', space=smem, size = 0x200, scoped, tag = 'input window, operand 2, single buffered']
    #allocation3 [shape = 's32[1]{0}', space=sflag, size = 0x4, scoped, tag = 'scoped memory for tpu_custom_call.1']
    #allocation4 [shape = 's32[1]{0}', space=sflag, size = 0x4, scoped, tag = 'scoped memory for tpu_custom_call.1']
    #allocation5 [shape = 'u8[512]{0}', space=smem, size = 0x200, scoped, tag = 'input window, operand 3, single buffered']
    #allocation6 [shape = 's32[1]{0}', space=sflag, size = 0x4, scoped, tag = 'scoped memory for tpu_custom_call.1']
    #allocation7 [shape = 'u8[2048]{0}', space=smem, size = 0x800, scoped, tag = 'input window, operand 4, single buffered']
    #allocation8 [shape = 'u8[512]{0}', space=vmem, size = 0x400, scoped, tag = 'output window, operand 0, single buffered']
    %10 = vsyncpa [#allocation4], 0
    %11 = vsyncpa [#allocation6], 0
    %12 = vsyncpa [#allocation3], 0
    // Predicated region
    $region2: #{tpu_custom_call.1} parent=1 // pred_check
      _
    $region3: #{tpu_custom_call.1} parent=1 // pred_check_branch
      %14 = sbr.rel (0) target = $region5
    $region4: #{tpu_custom_call.1} parent=1 // pred_region
      _
    $region5: #{tpu_custom_call.1} parent=1 // pred_fallthru
      _
    // Predicated region
    $region6: #{tpu_custom_call.1} parent=1 // pred_check
      _
    $region7: #{tpu_custom_call.1} parent=1 // pred_check_branch
      %16 = sbr.rel (0) target = $region9
    $region8: #{tpu_custom_call.1} parent=1 // pred_region
      _
    $region9: #{tpu_custom_call.1} parent=1 // pred_fallthru
      _
    // Predicated region
    $region10: #{tpu_custom_call.1} parent=1 // pred_check
      _
    $region11: #{tpu_custom_call.1} parent=1 // pred_check_branch
      %18 = sbr.rel (0) target = $region13
    $region12: #{tpu_custom_call.1} parent=1 // pred_region
      %s20 = ssub.s32 16, 16
      %21 = vsyncadd [#allocation4], %s20
      %s23 = sshll.u32 %s2, 4
      %s24 = int_to_ptr.vmem [resolvable:$true] %s23
      %26 = dma.vmem_to_smem %s24, 16, [#allocation2], [#allocation4]
    $region13: #{tpu_custom_call.1} parent=1 // pred_fallthru
      _
    // Predicated region
    $region14: #{tpu_custom_call.1} parent=1 // pred_check
      _
    $region15: #{tpu_custom_call.1} parent=1 // pred_check_branch
      %28 = sbr.rel (0) target = $region17
    $region16: #{tpu_custom_call.1} parent=1 // pred_region
      %s30 = ssub.s32 16, 16
      %31 = vsyncadd [#allocation6], %s30
      %s33 = sshll.u32 %s3, 4
      %s34 = int_to_ptr.vmem [resolvable:$true] %s33
      %36 = dma.vmem_to_smem %s34, 16, [#allocation5], [#allocation6]
    $region17: #{tpu_custom_call.1} parent=1 // pred_fallthru
      _
    // Predicated region
    $region18: #{tpu_custom_call.1} parent=1 // pred_check
      _
    $region19: #{tpu_custom_call.1} parent=1 // pred_check_branch
      %38 = sbr.rel (0) target = $region21
    $region20: #{tpu_custom_call.1} parent=1 // pred_region
      %s40 = ssub.s32 64, 64
      %41 = vsyncadd [#allocation6], %s40
      %s43 = sshll.u32 %s4, 4
      %s44 = int_to_ptr.vmem [resolvable:$true] %s43
      %46 = dma.vmem_to_smem %s44, 64, [#allocation7], [#allocation6]
    $region21: #{tpu_custom_call.1} parent=1 // pred_fallthru
      _
    // Predicated region
    $region22: #{tpu_custom_call.1} parent=1 // pred_check
      _
    $region23: #{tpu_custom_call.1} parent=1 // pred_check_branch
      %48 = sbr.rel (0) target = $region25
    $region24: #{tpu_custom_call.1} parent=1 // pred_region
      %49 = dma.done [#allocation4], 16
    $region25: #{tpu_custom_call.1} parent=1 // pred_fallthru
      _
    // Predicated region
    $region26: #{tpu_custom_call.1} parent=1 // pred_check
      _
    $region27: #{tpu_custom_call.1} parent=1 // pred_check_branch
      %51 = sbr.rel (0) target = $region29
    $region28: #{tpu_custom_call.1} parent=1 // pred_region
      %52 = dma.done [#allocation6], 16
    $region29: #{tpu_custom_call.1} parent=1 // pred_fallthru
      _
    // Predicated region
    $region30: #{tpu_custom_call.1} parent=1 // pred_check
      _
    $region31: #{tpu_custom_call.1} parent=1 // pred_check_branch
      %54 = sbr.rel (0) target = $region33
    $region32: #{tpu_custom_call.1} parent=1 // pred_region
      %55 = dma.done [#allocation6], 64
    $region33: #{tpu_custom_call.1} parent=1 // pred_fallthru
      _
    %56 = sfence
    %s57 = sld [smem:[#allocation2]]
    %s58 = sld [smem:[#allocation2 + $0x1]]
    %s59 = sld [smem:[#allocation2 + $0x2]]
    %s60 = sld [smem:[#allocation5]]
    %s61 = sld [smem:[#allocation5 + $0x1]]
    %s62 = sld [smem:[#allocation5 + $0x2]]
    %s63 = sld [smem:[#allocation7]]
    %s64 = sld [smem:[#allocation7 + $0x1]]
    %s65 = sld [smem:[#allocation7 + $0x2]]
    %s66 = sld [smem:[#allocation7 + $0x80]]
    %s67 = sld [smem:[#allocation7 + $0x81]]
    %s68 = sld [smem:[#allocation7 + $0x82]]
    %s69 = sld [smem:[#allocation7 + $0x100]]
    %s70 = sld [smem:[#allocation7 + $0x101]]
    %s71 = sld [smem:[#allocation7 + $0x102]]
    %v72 = vld [vmem:[%s1] sm:$0x1]
    %vm73 = vcmp.eq.s32.totalorder %v72, 0
    %vm74 = vcmp.eq.s32.totalorder %v72, 1
    %vm75 = vcmp.eq.s32.totalorder %v72, 2
    %v76 = vld [vmem:[%s0] sm:$0x1]
    %v77 = vld [vmem:[%s0 + $0x1] sm:$0x1]
    %v78 = vld [vmem:[%s0 + $0x2] sm:$0x1]
    %v79 = vstv %s57
    %v80 = vadd.f32 %v76, %v79
    %v81 = vsel %vm73, %v80, 0.0
    %v82 = vadd.f32 %v81, 0.0
    %v83 = vstv %s58
    %v84 = vadd.f32 %v77, %v83
    %v85 = vsel %vm74, %v84, 0.0
    %v86 = vadd.f32 %v82, %v85
    %v87 = vstv %s59
    %v88 = vadd.f32 %v78, %v87
    %v89 = vsel %vm75, %v88, 0.0
    %v90 = vadd.f32 %v86, %v89
    %v91 = vld [vmem:[%s1 + $0x1] sm:$0x1]
    %vm92 = vcmp.eq.s32.totalorder %v91, 0
    %vm93 = vcmp.eq.s32.totalorder %v91, 1
    %vm94 = vcmp.eq.s32.totalorder %v91, 2
    %s95 = scalar_lea.vmem %s0, 4
    %v96 = vld [vmem:[%s95] sm:$0x1]
    %v97 = vld [vmem:[%s95 + $0x1] sm:$0x1]
    %v98 = vld [vmem:[%s95 + $0x2] sm:$0x1]
    %v99 = vsel %vm92, %v96, 0.0
    %v100 = vadd.f32 %v90, %v99
    %vm101 = vmand %vm73, %vm92
    %v102 = vstv %s63
    %v103 = vsel %vm101, %v102, 0.0
    %v104 = vadd.f32 %v100, %v103
    %vm105 = vmand %vm74, %vm92
    %v106 = vstv %s66
    %v107 = vsel %vm105, %v106, 0.0
    %v108 = vadd.f32 %v104, %v107
    %vm109 = vmand %vm75, %vm92
    %v110 = vstv %s69
    %v111 = vsel %vm109, %v110, 0.0
    %v112 = vadd.f32 %v108, %v111
    %v113 = vsel %vm93, %v97, 0.0
    %v114 = vadd.f32 %v112, %v113
    %vm115 = vmand %vm73, %vm93
    %v116 = vstv %s64
    %v117 = vsel %vm115, %v116, 0.0
    %v118 = vadd.f32 %v114, %v117
    %vm119 = vmand %vm74, %vm93
    %v120 = vstv %s67
    %v121 = vsel %vm119, %v120, 0.0
    %v122 = vadd.f32 %v118, %v121
    %vm123 = vmand %vm75, %vm93
    %v124 = vstv %s70
    %v125 = vsel %vm123, %v124, 0.0
    %v126 = vadd.f32 %v122, %v125
    %v127 = vsel %vm94, %v98, 0.0
    %v128 = vadd.f32 %v126, %v127
    %vm129 = vmand %vm73, %vm94
    %v130 = vstv %s65
    %v131 = vsel %vm129, %v130, 0.0
    %v132 = vadd.f32 %v128, %v131
    %vm133 = vmand %vm74, %vm94
    %v134 = vstv %s68
    %v135 = vsel %vm133, %v134, 0.0
    %v136 = vadd.f32 %v132, %v135
    %vm137 = vmand %vm75, %vm94
    %v138 = vstv %s71
    %v139 = vsel %vm137, %v138, 0.0
    %v140 = vadd.f32 %v136, %v139
    %v141 = vadd.f32 %v80, %v102
    %v142 = vadd.f32 %v84, %v106
    %v143 = vadd.f32 %v88, %v110
    %v144 = vmax.f32 %v141, %v142
    %v145 = vmax.f32 %v144, %v143
    %v146 = vsub.f32 %v141, %v145
    %v147 = vmul.f32 %v146, 1.442695
    %v148 = vpow.pop %v147
    %v149 = vsub.f32 %v142, %v145
    %v150 = vmul.f32 %v149, 1.442695
    %v151 = vpow.pop %v150
    %v152 = vadd.f32 %v148, %v151
    %v153 = vsub.f32 %v143, %v145
    %v154 = vmul.f32 %v153, 1.442695
    %v155 = vpow.pop %v154
    %v156 = vadd.f32 %v152, %v155
    %v157 = vlog2.pop %v156
    %v158 = vmul.f32 %v157, 0.6931472
    %v159 = vadd.f32 %v145, %v158
    %v160 = vadd.f32 %v159, %v96
    %v161 = vadd.f32 %v80, %v116
    %v162 = vadd.f32 %v84, %v120
    %v163 = vadd.f32 %v88, %v124
    %v164 = vmax.f32 %v161, %v162
    %v165 = vmax.f32 %v164, %v163
    %v166 = vsub.f32 %v161, %v165
    %v167 = vmul.f32 %v166, 1.442695
    %v168 = vpow.pop %v167
    %v169 = vsub.f32 %v162, %v165
    %v170 = vmul.f32 %v169, 1.442695
    %v171 = vpow.pop %v170
    %v172 = vadd.f32 %v168, %v171
    %v173 = vsub.f32 %v163, %v165
    %v174 = vmul.f32 %v173, 1.442695
    %v175 = vpow.pop %v174
    %v176 = vadd.f32 %v172, %v175
    %v177 = vlog2.pop %v176
    %v178 = vmul.f32 %v177, 0.6931472
    %v179 = vadd.f32 %v165, %v178
    %v180 = vadd.f32 %v179, %v97
    %v181 = vadd.f32 %v80, %v130
    %v182 = vadd.f32 %v84, %v134
    %v183 = vadd.f32 %v88, %v138
    %v184 = vmax.f32 %v181, %v182
    %v185 = vmax.f32 %v184, %v183
    %v186 = vsub.f32 %v181, %v185
    %v187 = vmul.f32 %v186, 1.442695
    %v188 = vpow.pop %v187
    %v189 = vsub.f32 %v182, %v185
    %v190 = vmul.f32 %v189, 1.442695
    %v191 = vpow.pop %v190
    %v192 = vadd.f32 %v188, %v191
    %v193 = vsub.f32 %v183, %v185
    %v194 = vmul.f32 %v193, 1.442695
    %v195 = vpow.pop %v194
    %v196 = vadd.f32 %v192, %v195
    %v197 = vlog2.pop %v196
    %v198 = vmul.f32 %v197, 0.6931472
    %v199 = vadd.f32 %v185, %v198
    %v200 = vadd.f32 %v199, %v98
    %v201 = vld [vmem:[%s1 + $0x2] sm:$0x1]
    %vm202 = vcmp.eq.s32.totalorder %v201, 0
    %vm203 = vcmp.eq.s32.totalorder %v201, 1
    %vm204 = vcmp.eq.s32.totalorder %v201, 2
    %s205 = scalar_lea.vmem %s0, 8
    %v206 = vld [vmem:[%s205] sm:$0x1]
    %v207 = vld [vmem:[%s205 + $0x1] sm:$0x1]
    %v208 = vld [vmem:[%s205 + $0x2] sm:$0x1]
    %v209 = vsel %vm202, %v206, 0.0
    %v210 = vadd.f32 %v140, %v209
    %vm211 = vmand %vm92, %vm202
    %v212 = vsel %vm211, %v102, 0.0
    %v213 = vadd.f32 %v210, %v212
    %vm214 = vmand %vm93, %vm202
    %v215 = vsel %vm214, %v106, 0.0
    %v216 = vadd.f32 %v213, %v215
    %vm217 = vmand %vm94, %vm202
    %v218 = vsel %vm217, %v110, 0.0
    %v219 = vadd.f32 %v216, %v218
    %v220 = vsel %vm203, %v207, 0.0
    %v221 = vadd.f32 %v219, %v220
    %vm222 = vmand %vm92, %vm203
    %v223 = vsel %vm222, %v116, 0.0
    %v224 = vadd.f32 %v221, %v223
    %vm225 = vmand %vm93, %vm203
    %v226 = vsel %vm225, %v120, 0.0
    %v227 = vadd.f32 %v224, %v226
    %vm228 = vmand %vm94, %vm203
    %v229 = vsel %vm228, %v124, 0.0
    %v230 = vadd.f32 %v227, %v229
    %v231 = vsel %vm204, %v208, 0.0
    %v232 = vadd.f32 %v230, %v231
    %vm233 = vmand %vm92, %vm204
    %v234 = vsel %vm233, %v130, 0.0
    %v235 = vadd.f32 %v232, %v234
    %vm236 = vmand %vm93, %vm204
    %v237 = vsel %vm236, %v134, 0.0
    %v238 = vadd.f32 %v235, %v237
    %vm239 = vmand %vm94, %vm204
    %v240 = vsel %vm239, %v138, 0.0
    %v241 = vadd.f32 %v238, %v240
    %v242 = vadd.f32 %v160, %v102
    %v243 = vadd.f32 %v180, %v106
    %v244 = vadd.f32 %v200, %v110
    %v245 = vmax.f32 %v242, %v243
    %v246 = vmax.f32 %v245, %v244
    %v247 = vsub.f32 %v242, %v246
    %v248 = vmul.f32 %v247, 1.442695
    %v249 = vpow.pop %v248
    %v250 = vsub.f32 %v243, %v246
    %v251 = vmul.f32 %v250, 1.442695
    %v252 = vpow.pop %v251
    %v253 = vadd.f32 %v249, %v252
    %v254 = vsub.f32 %v244, %v246
    %v255 = vmul.f32 %v254, 1.442695
    %v256 = vpow.pop %v255
    %v257 = vadd.f32 %v253, %v256
    %v258 = vlog2.pop %v257
    %v259 = vmul.f32 %v258, 0.6931472
    %v260 = vadd.f32 %v246, %v259
    %v261 = vadd.f32 %v260, %v206
    %v262 = vadd.f32 %v160, %v116
    %v263 = vadd.f32 %v180, %v120
    %v264 = vadd.f32 %v200, %v124
    %v265 = vmax.f32 %v262, %v263
    %v266 = vmax.f32 %v265, %v264
    %v267 = vsub.f32 %v262, %v266
    %v268 = vmul.f32 %v267, 1.442695
    %v269 = vpow.pop %v268
    %v270 = vsub.f32 %v263, %v266
    %v271 = vmul.f32 %v270, 1.442695
    %v272 = vpow.pop %v271
    %v273 = vadd.f32 %v269, %v272
    %v274 = vsub.f32 %v264, %v266
    %v275 = vmul.f32 %v274, 1.442695
    %v276 = vpow.pop %v275
    %v277 = vadd.f32 %v273, %v276
    %v278 = vlog2.pop %v277
    %v279 = vmul.f32 %v278, 0.6931472
    %v280 = vadd.f32 %v266, %v279
    %v281 = vadd.f32 %v280, %v207
    %v282 = vadd.f32 %v160, %v130
    %v283 = vadd.f32 %v180, %v134
    %v284 = vadd.f32 %v200, %v138
    %v285 = vmax.f32 %v282, %v283
    %v286 = vmax.f32 %v285, %v284
    %v287 = vsub.f32 %v282, %v286
    %v288 = vmul.f32 %v287, 1.442695
    %v289 = vpow.pop %v288
    %v290 = vsub.f32 %v283, %v286
    %v291 = vmul.f32 %v290, 1.442695
    %v292 = vpow.pop %v291
    %v293 = vadd.f32 %v289, %v292
    %v294 = vsub.f32 %v284, %v286
    %v295 = vmul.f32 %v294, 1.442695
    %v296 = vpow.pop %v295
    %v297 = vadd.f32 %v293, %v296
    %v298 = vlog2.pop %v297
    %v299 = vmul.f32 %v298, 0.6931472
    %v300 = vadd.f32 %v286, %v299
    %v301 = vadd.f32 %v300, %v208
    %v302 = vld [vmem:[%s1 + $0x3] sm:$0x1]
    %vm303 = vcmp.eq.s32.totalorder %v302, 0
    %vm304 = vcmp.eq.s32.totalorder %v302, 1
    %vm305 = vcmp.eq.s32.totalorder %v302, 2
    %s306 = scalar_lea.vmem %s0, 12
    %v307 = vld [vmem:[%s306] sm:$0x1]
    %v308 = vld [vmem:[%s306 + $0x1] sm:$0x1]
    %v309 = vld [vmem:[%s306 + $0x2] sm:$0x1]
    %v310 = vsel %vm303, %v307, 0.0
    %v311 = vadd.f32 %v241, %v310
    %vm312 = vmand %vm202, %vm303
    %v313 = vsel %vm312, %v102, 0.0
    %v314 = vadd.f32 %v311, %v313
    %vm315 = vmand %vm203, %vm303
    %v316 = vsel %vm315, %v106, 0.0
    %v317 = vadd.f32 %v314, %v316
    %vm318 = vmand %vm204, %vm303
    %v319 = vsel %vm318, %v110, 0.0
    %v320 = vadd.f32 %v317, %v319
    %v321 = vsel %vm304, %v308, 0.0
    %v322 = vadd.f32 %v320, %v321
    %vm323 = vmand %vm202, %vm304
    %v324 = vsel %vm323, %v116, 0.0
    %v325 = vadd.f32 %v322, %v324
    %vm326 = vmand %vm203, %vm304
    %v327 = vsel %vm326, %v120, 0.0
    %v328 = vadd.f32 %v325, %v327
    %vm329 = vmand %vm204, %vm304
    %v330 = vsel %vm329, %v124, 0.0
    %v331 = vadd.f32 %v328, %v330
    %v332 = vsel %vm305, %v309, 0.0
    %v333 = vadd.f32 %v331, %v332
    %vm334 = vmand %vm202, %vm305
    %v335 = vsel %vm334, %v130, 0.0
    %v336 = vadd.f32 %v333, %v335
    %vm337 = vmand %vm203, %vm305
    %v338 = vsel %vm337, %v134, 0.0
    %v339 = vadd.f32 %v336, %v338
    %vm340 = vmand %vm204, %vm305
    %v341 = vsel %vm340, %v138, 0.0
    %v342 = vadd.f32 %v339, %v341
    %v343 = vadd.f32 %v261, %v102
    %v344 = vadd.f32 %v281, %v106
    %v345 = vadd.f32 %v301, %v110
    %v346 = vmax.f32 %v343, %v344
    %v347 = vmax.f32 %v346, %v345
    %v348 = vsub.f32 %v343, %v347
    %v349 = vmul.f32 %v348, 1.442695
    %v350 = vpow.pop %v349
    %v351 = vsub.f32 %v344, %v347
    %v352 = vmul.f32 %v351, 1.442695
    %v353 = vpow.pop %v352
    %v354 = vadd.f32 %v350, %v353
    %v355 = vsub.f32 %v345, %v347
    %v356 = vmul.f32 %v355, 1.442695
    %v357 = vpow.pop %v356
    %v358 = vadd.f32 %v354, %v357
    %v359 = vlog2.pop %v358
    %v360 = vmul.f32 %v359, 0.6931472
    %v361 = vadd.f32 %v347, %v360
    %v362 = vadd.f32 %v361, %v307
    %v363 = vadd.f32 %v261, %v116
    %v364 = vadd.f32 %v281, %v120
    %v365 = vadd.f32 %v301, %v124
    %v366 = vmax.f32 %v363, %v364
    %v367 = vmax.f32 %v366, %v365
    %v368 = vsub.f32 %v363, %v367
    %v369 = vmul.f32 %v368, 1.442695
    %v370 = vpow.pop %v369
    %v371 = vsub.f32 %v364, %v367
    %v372 = vmul.f32 %v371, 1.442695
    %v373 = vpow.pop %v372
    %v374 = vadd.f32 %v370, %v373
    %v375 = vsub.f32 %v365, %v367
    %v376 = vmul.f32 %v375, 1.442695
    %v377 = vpow.pop %v376
    %v378 = vadd.f32 %v374, %v377
    %v379 = vlog2.pop %v378
    %v380 = vmul.f32 %v379, 0.6931472
    %v381 = vadd.f32 %v367, %v380
    %v382 = vadd.f32 %v381, %v308
    %v383 = vadd.f32 %v261, %v130
    %v384 = vadd.f32 %v281, %v134
    %v385 = vadd.f32 %v301, %v138
    %v386 = vmax.f32 %v383, %v384
    %v387 = vmax.f32 %v386, %v385
    %v388 = vsub.f32 %v383, %v387
    %v389 = vmul.f32 %v388, 1.442695
    %v390 = vpow.pop %v389
    %v391 = vsub.f32 %v384, %v387
    %v392 = vmul.f32 %v391, 1.442695
    %v393 = vpow.pop %v392
    %v394 = vadd.f32 %v390, %v393
    %v395 = vsub.f32 %v385, %v387
    %v396 = vmul.f32 %v395, 1.442695
    %v397 = vpow.pop %v396
    %v398 = vadd.f32 %v394, %v397
    %v399 = vlog2.pop %v398
    %v400 = vmul.f32 %v399, 0.6931472
    %v401 = vadd.f32 %v387, %v400
    %v402 = vadd.f32 %v401, %v309
    %v403 = vld [vmem:[%s1 + $0x4] sm:$0x1]
    %vm404 = vcmp.eq.s32.totalorder %v403, 0
    %vm405 = vcmp.eq.s32.totalorder %v403, 1
    %vm406 = vcmp.eq.s32.totalorder %v403, 2
    %s407 = scalar_lea.vmem %s0, 16
    %v408 = vld [vmem:[%s407] sm:$0x1]
    %v409 = vld [vmem:[%s407 + $0x1] sm:$0x1]
    %v410 = vld [vmem:[%s407 + $0x2] sm:$0x1]
    %v411 = vsel %vm404, %v408, 0.0
    %v412 = vadd.f32 %v342, %v411
    %vm413 = vmand %vm303, %vm404
    %v414 = vsel %vm413, %v102, 0.0
    %v415 = vadd.f32 %v412, %v414
    %vm416 = vmand %vm304, %vm404
    %v417 = vsel %vm416, %v106, 0.0
    %v418 = vadd.f32 %v415, %v417
    %vm419 = vmand %vm305, %vm404
    %v420 = vsel %vm419, %v110, 0.0
    %v421 = vadd.f32 %v418, %v420
    %v422 = vsel %vm405, %v409, 0.0
    %v423 = vadd.f32 %v421, %v422
    %vm424 = vmand %vm303, %vm405
    %v425 = vsel %vm424, %v116, 0.0
    %v426 = vadd.f32 %v423, %v425
    %vm427 = vmand %vm304, %vm405
    %v428 = vsel %vm427, %v120, 0.0
    %v429 = vadd.f32 %v426, %v428
    %vm430 = vmand %vm305, %vm405
    %v431 = vsel %vm430, %v124, 0.0
    %v432 = vadd.f32 %v429, %v431
    %v433 = vsel %vm406, %v410, 0.0
    %v434 = vadd.f32 %v432, %v433
    %vm435 = vmand %vm303, %vm406
    %v436 = vsel %vm435, %v130, 0.0
    %v437 = vadd.f32 %v434, %v436
    %vm438 = vmand %vm304, %vm406
    %v439 = vsel %vm438, %v134, 0.0
    %v440 = vadd.f32 %v437, %v439
    %vm441 = vmand %vm305, %vm406
    %v442 = vsel %vm441, %v138, 0.0
    %v443 = vadd.f32 %v440, %v442
    %v444 = vadd.f32 %v362, %v102
    %v445 = vadd.f32 %v382, %v106
    %v446 = vadd.f32 %v402, %v110
    %v447 = vmax.f32 %v444, %v445
    %v448 = vmax.f32 %v447, %v446
    %v449 = vsub.f32 %v444, %v448
    %v450 = vmul.f32 %v449, 1.442695
    %v451 = vpow.pop %v450
    %v452 = vsub.f32 %v445, %v448
    %v453 = vmul.f32 %v452, 1.442695
    %v454 = vpow.pop %v453
    %v455 = vadd.f32 %v451, %v454
    %v456 = vsub.f32 %v446, %v448
    %v457 = vmul.f32 %v456, 1.442695
    %v458 = vpow.pop %v457
    %v459 = vadd.f32 %v455, %v458
    %v460 = vlog2.pop %v459
    %v461 = vmul.f32 %v460, 0.6931472
    %v462 = vadd.f32 %v448, %v461
    %v463 = vadd.f32 %v462, %v408
    %v464 = vadd.f32 %v362, %v116
    %v465 = vadd.f32 %v382, %v120
    %v466 = vadd.f32 %v402, %v124
    %v467 = vmax.f32 %v464, %v465
    %v468 = vmax.f32 %v467, %v466
    %v469 = vsub.f32 %v464, %v468
    %v470 = vmul.f32 %v469, 1.442695
    %v471 = vpow.pop %v470
    %v472 = vsub.f32 %v465, %v468
    %v473 = vmul.f32 %v472, 1.442695
    %v474 = vpow.pop %v473
    %v475 = vadd.f32 %v471, %v474
    %v476 = vsub.f32 %v466, %v468
    %v477 = vmul.f32 %v476, 1.442695
    %v478 = vpow.pop %v477
    %v479 = vadd.f32 %v475, %v478
    %v480 = vlog2.pop %v479
    %v481 = vmul.f32 %v480, 0.6931472
    %v482 = vadd.f32 %v468, %v481
    %v483 = vadd.f32 %v482, %v409
    %v484 = vadd.f32 %v362, %v130
    %v485 = vadd.f32 %v382, %v134
    %v486 = vadd.f32 %v402, %v138
    %v487 = vmax.f32 %v484, %v485
    %v488 = vmax.f32 %v487, %v486
    %v489 = vsub.f32 %v484, %v488
    %v490 = vmul.f32 %v489, 1.442695
    %v491 = vpow.pop %v490
    %v492 = vsub.f32 %v485, %v488
    %v493 = vmul.f32 %v492, 1.442695
    %v494 = vpow.pop %v493
    %v495 = vadd.f32 %v491, %v494
    %v496 = vsub.f32 %v486, %v488
    %v497 = vmul.f32 %v496, 1.442695
    %v498 = vpow.pop %v497
    %v499 = vadd.f32 %v495, %v498
    %v500 = vlog2.pop %v499
    %v501 = vmul.f32 %v500, 0.6931472
    %v502 = vadd.f32 %v488, %v501
    %v503 = vadd.f32 %v502, %v410
    %v504 = vld [vmem:[%s1 + $0x5] sm:$0x1]
    %vm505 = vcmp.eq.s32.totalorder %v504, 0
    %vm506 = vcmp.eq.s32.totalorder %v504, 1
    %vm507 = vcmp.eq.s32.totalorder %v504, 2
    %s508 = scalar_lea.vmem %s0, 20
    %v509 = vld [vmem:[%s508] sm:$0x1]
    %v510 = vld [vmem:[%s508 + $0x1] sm:$0x1]
    %v511 = vld [vmem:[%s508 + $0x2] sm:$0x1]
    %v512 = vsel %vm505, %v509, 0.0
    %v513 = vadd.f32 %v443, %v512
    %vm514 = vmand %vm404, %vm505
    %v515 = vsel %vm514, %v102, 0.0
    %v516 = vadd.f32 %v513, %v515
    %vm517 = vmand %vm405, %vm505
    %v518 = vsel %vm517, %v106, 0.0
    %v519 = vadd.f32 %v516, %v518
    %vm520 = vmand %vm406, %vm505
    %v521 = vsel %vm520, %v110, 0.0
    %v522 = vadd.f32 %v519, %v521
    %v523 = vsel %vm506, %v510, 0.0
    %v524 = vadd.f32 %v522, %v523
    %vm525 = vmand %vm404, %vm506
    %v526 = vsel %vm525, %v116, 0.0
    %v527 = vadd.f32 %v524, %v526
    %vm528 = vmand %vm405, %vm506
    %v529 = vsel %vm528, %v120, 0.0
    %v530 = vadd.f32 %v527, %v529
    %vm531 = vmand %vm406, %vm506
    %v532 = vsel %vm531, %v124, 0.0
    %v533 = vadd.f32 %v530, %v532
    %v534 = vsel %vm507, %v511, 0.0
    %v535 = vadd.f32 %v533, %v534
    %vm536 = vmand %vm404, %vm507
    %v537 = vsel %vm536, %v130, 0.0
    %v538 = vadd.f32 %v535, %v537
    %vm539 = vmand %vm405, %vm507
    %v540 = vsel %vm539, %v134, 0.0
    %v541 = vadd.f32 %v538, %v540
    %vm542 = vmand %vm406, %vm507
    %v543 = vsel %vm542, %v138, 0.0
    %v544 = vadd.f32 %v541, %v543
    %v545 = vadd.f32 %v463, %v102
    %v546 = vadd.f32 %v483, %v106
    %v547 = vadd.f32 %v503, %v110
    %v548 = vmax.f32 %v545, %v546
    %v549 = vmax.f32 %v548, %v547
    %v550 = vsub.f32 %v545, %v549
    %v551 = vmul.f32 %v550, 1.442695
    %v552 = vpow.pop %v551
    %v553 = vsub.f32 %v546, %v549
    %v554 = vmul.f32 %v553, 1.442695
    %v555 = vpow.pop %v554
    %v556 = vadd.f32 %v552, %v555
    %v557 = vsub.f32 %v547, %v549
    %v558 = vmul.f32 %v557, 1.442695
    %v559 = vpow.pop %v558
    %v560 = vadd.f32 %v556, %v559
    %v561 = vlog2.pop %v560
    %v562 = vmul.f32 %v561, 0.6931472
    %v563 = vadd.f32 %v549, %v562
    %v564 = vadd.f32 %v563, %v509
    %v565 = vadd.f32 %v463, %v116
    %v566 = vadd.f32 %v483, %v120
    %v567 = vadd.f32 %v503, %v124
    %v568 = vmax.f32 %v565, %v566
    %v569 = vmax.f32 %v568, %v567
    %v570 = vsub.f32 %v565, %v569
    %v571 = vmul.f32 %v570, 1.442695
    %v572 = vpow.pop %v571
    %v573 = vsub.f32 %v566, %v569
    %v574 = vmul.f32 %v573, 1.442695
    %v575 = vpow.pop %v574
    %v576 = vadd.f32 %v572, %v575
    %v577 = vsub.f32 %v567, %v569
    %v578 = vmul.f32 %v577, 1.442695
    %v579 = vpow.pop %v578
    %v580 = vadd.f32 %v576, %v579
    %v581 = vlog2.pop %v580
    %v582 = vmul.f32 %v581, 0.6931472
    %v583 = vadd.f32 %v569, %v582
    %v584 = vadd.f32 %v583, %v510
    %v585 = vadd.f32 %v463, %v130
    %v586 = vadd.f32 %v483, %v134
    %v587 = vadd.f32 %v503, %v138
    %v588 = vmax.f32 %v585, %v586
    %v589 = vmax.f32 %v588, %v587
    %v590 = vsub.f32 %v585, %v589
    %v591 = vmul.f32 %v590, 1.442695
    %v592 = vpow.pop %v591
    %v593 = vsub.f32 %v586, %v589
    %v594 = vmul.f32 %v593, 1.442695
    %v595 = vpow.pop %v594
    %v596 = vadd.f32 %v592, %v595
    %v597 = vsub.f32 %v587, %v589
    %v598 = vmul.f32 %v597, 1.442695
    %v599 = vpow.pop %v598
    %v600 = vadd.f32 %v596, %v599
    %v601 = vlog2.pop %v600
    %v602 = vmul.f32 %v601, 0.6931472
    %v603 = vadd.f32 %v589, %v602
    %v604 = vadd.f32 %v603, %v511
    %v605 = vld [vmem:[%s1 + $0x6] sm:$0x1]
    %vm606 = vcmp.eq.s32.totalorder %v605, 0
    %vm607 = vcmp.eq.s32.totalorder %v605, 1
    %vm608 = vcmp.eq.s32.totalorder %v605, 2
    %s609 = scalar_lea.vmem %s0, 24
    %v610 = vld [vmem:[%s609] sm:$0x1]
    %v611 = vld [vmem:[%s609 + $0x1] sm:$0x1]
    %v612 = vld [vmem:[%s609 + $0x2] sm:$0x1]
    %v613 = vsel %vm606, %v610, 0.0
    %v614 = vadd.f32 %v544, %v613
    %vm615 = vmand %vm505, %vm606
    %v616 = vsel %vm615, %v102, 0.0
    %v617 = vadd.f32 %v614, %v616
    %vm618 = vmand %vm506, %vm606
    %v619 = vsel %vm618, %v106, 0.0
    %v620 = vadd.f32 %v617, %v619
    %vm621 = vmand %vm507, %vm606
    %v622 = vsel %vm621, %v110, 0.0
    %v623 = vadd.f32 %v620, %v622
    %v624 = vsel %vm607, %v611, 0.0
    %v625 = vadd.f32 %v623, %v624
    %vm626 = vmand %vm505, %vm607
    %v627 = vsel %vm626, %v116, 0.0
    %v628 = vadd.f32 %v625, %v627
    %vm629 = vmand %vm506, %vm607
    %v630 = vsel %vm629, %v120, 0.0
    %v631 = vadd.f32 %v628, %v630
    %vm632 = vmand %vm507, %vm607
    %v633 = vsel %vm632, %v124, 0.0
    %v634 = vadd.f32 %v631, %v633
    %v635 = vsel %vm608, %v612, 0.0
    %v636 = vadd.f32 %v634, %v635
    %vm637 = vmand %vm505, %vm608
    %v638 = vsel %vm637, %v130, 0.0
    %v639 = vadd.f32 %v636, %v638
    %vm640 = vmand %vm506, %vm608
    %v641 = vsel %vm640, %v134, 0.0
    %v642 = vadd.f32 %v639, %v641
    %vm643 = vmand %vm507, %vm608
    %v644 = vsel %vm643, %v138, 0.0
    %v645 = vadd.f32 %v642, %v644
    %v646 = vadd.f32 %v564, %v102
    %v647 = vadd.f32 %v584, %v106
    %v648 = vadd.f32 %v604, %v110
    %v649 = vmax.f32 %v646, %v647
    %v650 = vmax.f32 %v649, %v648
    %v651 = vsub.f32 %v646, %v650
    %v652 = vmul.f32 %v651, 1.442695
    %v653 = vpow.pop %v652
    %v654 = vsub.f32 %v647, %v650
    %v655 = vmul.f32 %v654, 1.442695
    %v656 = vpow.pop %v655
    %v657 = vadd.f32 %v653, %v656
    %v658 = vsub.f32 %v648, %v650
    %v659 = vmul.f32 %v658, 1.442695
    %v660 = vpow.pop %v659
    %v661 = vadd.f32 %v657, %v660
    %v662 = vlog2.pop %v661
    %v663 = vmul.f32 %v662, 0.6931472
    %v664 = vadd.f32 %v650, %v663
    %v665 = vadd.f32 %v664, %v610
    %v666 = vadd.f32 %v564, %v116
    %v667 = vadd.f32 %v584, %v120
    %v668 = vadd.f32 %v604, %v124
    %v669 = vmax.f32 %v666, %v667
    %v670 = vmax.f32 %v669, %v668
    %v671 = vsub.f32 %v666, %v670
    %v672 = vmul.f32 %v671, 1.442695
    %v673 = vpow.pop %v672
    %v674 = vsub.f32 %v667, %v670
    %v675 = vmul.f32 %v674, 1.442695
    %v676 = vpow.pop %v675
    %v677 = vadd.f32 %v673, %v676
    %v678 = vsub.f32 %v668, %v670
    %v679 = vmul.f32 %v678, 1.442695
    %v680 = vpow.pop %v679
    %v681 = vadd.f32 %v677, %v680
    %v682 = vlog2.pop %v681
    %v683 = vmul.f32 %v682, 0.6931472
    %v684 = vadd.f32 %v670, %v683
    %v685 = vadd.f32 %v684, %v611
    %v686 = vadd.f32 %v564, %v130
    %v687 = vadd.f32 %v584, %v134
    %v688 = vadd.f32 %v604, %v138
    %v689 = vmax.f32 %v686, %v687
    %v690 = vmax.f32 %v689, %v688
    %v691 = vsub.f32 %v686, %v690
    %v692 = vmul.f32 %v691, 1.442695
    %v693 = vpow.pop %v692
    %v694 = vsub.f32 %v687, %v690
    %v695 = vmul.f32 %v694, 1.442695
    %v696 = vpow.pop %v695
    %v697 = vadd.f32 %v693, %v696
    %v698 = vsub.f32 %v688, %v690
    %v699 = vmul.f32 %v698, 1.442695
    %v700 = vpow.pop %v699
    %v701 = vadd.f32 %v697, %v700
    %v702 = vlog2.pop %v701
    %v703 = vmul.f32 %v702, 0.6931472
    %v704 = vadd.f32 %v690, %v703
    %v705 = vadd.f32 %v704, %v612
    %v706 = vld [vmem:[%s1 + $0x7] sm:$0x1]
    %vm707 = vcmp.eq.s32.totalorder %v706, 0
    %vm708 = vcmp.eq.s32.totalorder %v706, 1
    %vm709 = vcmp.eq.s32.totalorder %v706, 2
    %s710 = scalar_lea.vmem %s0, 28
    %v711 = vld [vmem:[%s710] sm:$0x1]
    %v712 = vld [vmem:[%s710 + $0x1] sm:$0x1]
    %v713 = vld [vmem:[%s710 + $0x2] sm:$0x1]
    %v714 = vsel %vm707, %v711, 0.0
    %v715 = vadd.f32 %v645, %v714
    %vm716 = vmand %vm606, %vm707
    %v717 = vsel %vm716, %v102, 0.0
    %v718 = vadd.f32 %v715, %v717
    %vm719 = vmand %vm607, %vm707
    %v720 = vsel %vm719, %v106, 0.0
    %v721 = vadd.f32 %v718, %v720
    %vm722 = vmand %vm608, %vm707
    %v723 = vsel %vm722, %v110, 0.0
    %v724 = vadd.f32 %v721, %v723
    %v725 = vsel %vm708, %v712, 0.0
    %v726 = vadd.f32 %v724, %v725
    %vm727 = vmand %vm606, %vm708
    %v728 = vsel %vm727, %v116, 0.0
    %v729 = vadd.f32 %v726, %v728
    %vm730 = vmand %vm607, %vm708
    %v731 = vsel %vm730, %v120, 0.0
    %v732 = vadd.f32 %v729, %v731
    %vm733 = vmand %vm608, %vm708
    %v734 = vsel %vm733, %v124, 0.0
    %v735 = vadd.f32 %v732, %v734
    %v736 = vsel %vm709, %v713, 0.0
    %v737 = vadd.f32 %v735, %v736
    %vm738 = vmand %vm606, %vm709
    %v739 = vsel %vm738, %v130, 0.0
    %v740 = vadd.f32 %v737, %v739
    %vm741 = vmand %vm607, %vm709
    %v742 = vsel %vm741, %v134, 0.0
    %v743 = vadd.f32 %v740, %v742
    %vm744 = vmand %vm608, %vm709
    %v745 = vsel %vm744, %v138, 0.0
    %v746 = vadd.f32 %v743, %v745
    %v747 = vadd.f32 %v665, %v102
    %v748 = vadd.f32 %v685, %v106
    %v749 = vadd.f32 %v705, %v110
    %v750 = vmax.f32 %v747, %v748
    %v751 = vmax.f32 %v750, %v749
    %v752 = vsub.f32 %v747, %v751
    %v753 = vmul.f32 %v752, 1.442695
    %v754 = vpow.pop %v753
    %v755 = vsub.f32 %v748, %v751
    %v756 = vmul.f32 %v755, 1.442695
    %v757 = vpow.pop %v756
    %v758 = vadd.f32 %v754, %v757
    %v759 = vsub.f32 %v749, %v751
    %v760 = vmul.f32 %v759, 1.442695
    %v761 = vpow.pop %v760
    %v762 = vadd.f32 %v758, %v761
    %v763 = vlog2.pop %v762
    %v764 = vmul.f32 %v763, 0.6931472
    %v765 = vadd.f32 %v751, %v764
    %v766 = vadd.f32 %v765, %v711
    %v767 = vadd.f32 %v665, %v116
    %v768 = vadd.f32 %v685, %v120
    %v769 = vadd.f32 %v705, %v124
    %v770 = vmax.f32 %v767, %v768
    %v771 = vmax.f32 %v770, %v769
    %v772 = vsub.f32 %v767, %v771
    %v773 = vmul.f32 %v772, 1.442695
    %v774 = vpow.pop %v773
    %v775 = vsub.f32 %v768, %v771
    %v776 = vmul.f32 %v775, 1.442695
    %v777 = vpow.pop %v776
    %v778 = vadd.f32 %v774, %v777
    %v779 = vsub.f32 %v769, %v771
    %v780 = vmul.f32 %v779, 1.442695
    %v781 = vpow.pop %v780
    %v782 = vadd.f32 %v778, %v781
    %v783 = vlog2.pop %v782
    %v784 = vmul.f32 %v783, 0.6931472
    %v785 = vadd.f32 %v771, %v784
    %v786 = vadd.f32 %v785, %v712
    %v787 = vadd.f32 %v665, %v130
    %v788 = vadd.f32 %v685, %v134
    %v789 = vadd.f32 %v705, %v138
    %v790 = vmax.f32 %v787, %v788
    %v791 = vmax.f32 %v790, %v789
    %v792 = vsub.f32 %v787, %v791
    %v793 = vmul.f32 %v792, 1.442695
    %v794 = vpow.pop %v793
    %v795 = vsub.f32 %v788, %v791
    %v796 = vmul.f32 %v795, 1.442695
    %v797 = vpow.pop %v796
    %v798 = vadd.f32 %v794, %v797
    %v799 = vsub.f32 %v789, %v791
    %v800 = vmul.f32 %v799, 1.442695
    %v801 = vpow.pop %v800
    %v802 = vadd.f32 %v798, %v801
    %v803 = vlog2.pop %v802
    %v804 = vmul.f32 %v803, 0.6931472
    %v805 = vadd.f32 %v791, %v804
    %v806 = vadd.f32 %v805, %v713
    %v807 = vstv %s60
    %v808 = vsel %vm707, %v807, 0.0
    %v809 = vadd.f32 %v746, %v808
    %v810 = vstv %s61
    %v811 = vsel %vm708, %v810, 0.0
    %v812 = vadd.f32 %v809, %v811
    %v813 = vstv %s62
    %v814 = vsel %vm709, %v813, 0.0
    %v815 = vadd.f32 %v812, %v814
    %v816 = vadd.f32 %v766, %v807
    %v817 = vadd.f32 %v786, %v810
    %v818 = vadd.f32 %v806, %v813
    %v819 = vmax.f32 %v816, %v817
    %v820 = vmax.f32 %v819, %v818
    %v821 = vsub.f32 %v816, %v820
    %v822 = vmul.f32 %v821, 1.442695
    %v823 = vpow.pop %v822
    %v824 = vsub.f32 %v817, %v820
    %v825 = vmul.f32 %v824, 1.442695
    %v826 = vpow.pop %v825
    %v827 = vadd.f32 %v823, %v826
    %v828 = vsub.f32 %v818, %v820
    %v829 = vmul.f32 %v828, 1.442695
    %v830 = vpow.pop %v829
    %v831 = vadd.f32 %v827, %v830
    %v832 = vlog2.pop %v831
    %v833 = vmul.f32 %v832, 0.6931472
    %v834 = vadd.f32 %v820, %v833
    %v835 = vsub.f32 %v815, %v834
    %836 = vst [vmem:[#allocation8] sm:$0x1] %v835
    // Predicated region
    $region34: #{tpu_custom_call.1} parent=1 // pred_check
      _
    $region35: #{tpu_custom_call.1} parent=1 // pred_check_branch
      %838 = sbr.rel (0) target = $region37
    $region36: #{tpu_custom_call.1} parent=1 // pred_region
      %s840 = ssub.s32 16, 16
      %841 = vsyncadd [#allocation3], %s840
      %s843 = sshll.u32 [#allocation8], 4
      %s844 = int_to_ptr.vmem [resolvable:$true] %s843
      %846 = dma.vmem_to_hbm [thread:$0]  %s844, 16, %s5, [#allocation3]
    $region37: #{tpu_custom_call.1} parent=1 // pred_fallthru
      _
    // Predicated region
    $region38: #{tpu_custom_call.1} parent=1 // pred_check
      _
    $region39: #{tpu_custom_call.1} parent=1 // pred_check_branch
      %848 = sbr.rel (0) target = $region41
    $region40: #{tpu_custom_call.1} parent=1 // pred_region
      %849 = dma.done [#allocation3], 16
    $region41: #{tpu_custom_call.1} parent=1 // pred_fallthru
      _
    %850 = vsyncpa [#allocation3], 1
    %851 = vsyncpa [#allocation4], 1
    %852 = vsyncpa [#allocation6], 1

</llo_original>
